<compile_context>
chip_gen: v5e
topology: v5e:2x2
jax: 0.10.0
libtpu: 0.0.40
codegen_flags: <defaults>
</compile_context>

<pallas_src>
import functools

import jax
import jax.numpy as jnp
import numpy as np
from jax.experimental import pallas as pl
from jax.experimental.pallas import tpu as pltpu


def _gru_classifier_kernel(
    emb_ref,        # (S*B, H)   token embeddings, time-major flattened
    h0_ref,         # (2, B, H)  initial hidden state
    wih0_t_ref,     # (H, 3H)    layer-0 W_ih^T
    whh0_t_ref,     # (H, 3H)    layer-0 W_hh^T
    bih0_ref,       # (1, 3H)
    bhh0_ref,       # (1, 3H)
    w1_blk_ref,     # (2H, 6H)   layer-1 block-diag [[W_ih1^T, 0], [0, W_hh1^T]]
    b1_ref,         # (1, 6H)    [b_ih1 | b_hh1]
    wlin_t_ref,     # (H, 1)
    blin_ref,       # (1, 1)
    out_ref,        # (B, 1)     sigmoid(linear(last output))
    hout_ref,       # (2, B, H)  final hidden state
    *, seq_len, batch, hidden,
):
    H = hidden
    B = batch

    # ---- Prologue: layer-0 input projection for ALL timesteps at once ------
    # One (S*B, H) @ (H, 3H) matmul instead of S tiny matmuls inside the
    # serial recurrence (cuDNN-GRU style hoisting). Includes b_ih0.
    gi0_all = jnp.dot(emb_ref[...], wih0_t_ref[...],
                      preferred_element_type=jnp.float32) + bih0_ref[...]

    whh0_t = whh0_t_ref[...]
    bhh0 = bhh0_ref[...]
    w1_blk = w1_blk_ref[...]
    b1 = b1_ref[...]

    h_l0 = h0_ref[0]   # (B, H)
    h_l1 = h0_ref[1]   # (B, H)

    # ---- Recurrence: fully unrolled (seq_len is small & static) ------------
    # layer-0 of step t+1 only depends on h_l0(t), so the unrolled body lets
    # the scheduler overlap layer-1(t) with layer-0(t+1).
    # TODO(synk): for large seq_len switch to lax.fori_loop(..., unroll=k).
    for t in range(seq_len):
        # ----- layer 0: only the h-dependent half remains per step -----
        gi0 = gi0_all[t * B:(t + 1) * B, :]                         # (B, 3H)
        gh0 = jnp.dot(h_l0, whh0_t,
                      preferred_element_type=jnp.float32) + bhh0    # (B, 3H)
        r0 = jax.nn.sigmoid(gi0[:, 0:H] + gh0[:, 0:H])
        z0 = jax.nn.sigmoid(gi0[:, H:2 * H] + gh0[:, H:2 * H])
        n0 = jnp.tanh(gi0[:, 2 * H:3 * H] + r0 * gh0[:, 2 * H:3 * H])
        h_l0 = (1.0 - z0) * n0 + z0 * h_l0

        # ----- layer 1: single fused MXU push (block-diagonal weights) -----
        # [x, h] @ [[W_ih^T, 0], [0, W_hh^T]] keeps gi | gh separable in one
        # (B, 6H) result, so the n gate's r * gh_n coupling stays correct.
        xh = jnp.concatenate([h_l0, h_l1], axis=1)                  # (B, 2H)
        g1 = jnp.dot(xh, w1_blk,
                     preferred_element_type=jnp.float32) + b1       # (B, 6H)
        r1 = jax.nn.sigmoid(g1[:, 0:H] + g1[:, 3 * H:4 * H])
        z1 = jax.nn.sigmoid(g1[:, H:2 * H] + g1[:, 4 * H:5 * H])
        n1 = jnp.tanh(g1[:, 2 * H:3 * H] + r1 * g1[:, 5 * H:6 * H])
        h_l1 = (1.0 - z1) * n1 + z1 * h_l1

    # ---- Epilogue: final hidden state + classifier head --------------------
    hout_ref[0] = h_l0
    hout_ref[1] = h_l1
    logit = jnp.dot(h_l1, wlin_t_ref[...],
                    preferred_element_type=jnp.float32) + blin_ref[...]
    out_ref[...] = jax.nn.sigmoid(logit)


def gru_classifier_forward(x_tokens, h0, params, *, hidden):
    """x_tokens: (seq, batch) int32, h0: (2, batch, hidden) f32."""
    seq_len, batch = x_tokens.shape
    H = hidden

    # Glue: embedding gather stays in plain JAX; flatten (S, B, H) -> (S*B, H)
    # so the kernel prologue can run one fat input projection.
    emb = jnp.take(params["embedding"], x_tokens, axis=0).reshape(seq_len * batch, H)

    # Layer-1 fused block-diagonal weight and concatenated bias (built once;
    # constant-folded / cached in real use).
    w1_blk = jnp.zeros((2 * H, 6 * H), jnp.float32)
    w1_blk = w1_blk.at[:H, :3 * H].set(params["w_ih1_t"])
    w1_blk = w1_blk.at[H:, 3 * H:].set(params["w_hh1_t"])
    b1 = jnp.concatenate([params["b_ih1"], params["b_hh1"]], axis=1)   # (1, 6H)

    kernel = functools.partial(_gru_classifier_kernel,
                               seq_len=seq_len, batch=batch, hidden=H)

    vmem_spec = lambda: pl.BlockSpec(memory_space=pltpu.MemorySpace.VMEM)

    out, h_out = pl.pallas_call(
        kernel,
        out_shape=(
            jax.ShapeDtypeStruct((batch, 1), jnp.float32),
            jax.ShapeDtypeStruct((2, batch, H), jnp.float32),
        ),
        in_specs=[vmem_spec() for _ in range(10)],
        out_specs=(vmem_spec(), vmem_spec()),
    )(
        emb, h0,
        params["w_ih0_t"], params["w_hh0_t"], params["b_ih0"], params["b_hh0"],
        w1_blk, b1,
        params["w_lin_t"], params["b_lin"],
    )
    return out, h_out


def _reference_forward(x_tokens, h0, params, *, hidden):
    """Pure-JAX reference mirroring torch semantics (eval mode)."""
    emb = jnp.take(params["embedding"], x_tokens, axis=0)  # (S, B, H)

    def cell(x_t, h_prev, w_ih_t, w_hh_t, b_ih, b_hh):
        gi = x_t @ w_ih_t + b_ih
        gh = h_prev @ w_hh_t + b_hh
        r = jax.nn.sigmoid(gi[:, :hidden] + gh[:, :hidden])
        z = jax.nn.sigmoid(gi[:, hidden:2 * hidden] + gh[:, hidden:2 * hidden])
        n = jnp.tanh(gi[:, 2 * hidden:] + r * gh[:, 2 * hidden:])
        return (1.0 - z) * n + z * h_prev

    def step(h, x_t):
        h0_new = cell(x_t, h[0], params["w_ih0_t"], params["w_hh0_t"],
                      params["b_ih0"], params["b_hh0"])
        h1_new = cell(h0_new, h[1], params["w_ih1_t"], params["w_hh1_t"],
                      params["b_ih1"], params["b_hh1"])
        h_new = jnp.stack([h0_new, h1_new], axis=0)
        return h_new, h1_new

    h_final, outs = jax.lax.scan(step, h0, emb)
    logit = outs[-1] @ params["w_lin_t"] + params["b_lin"]
    return jax.nn.sigmoid(logit), h_final


def _init_params(key, vocab_size, hidden):
    """Deterministic parameter init (uniform, like PyTorch's default scaling)."""
    ks = jax.random.split(key, 12)
    s = 1.0 / np.sqrt(hidden)
    u = lambda k, shape: jax.random.uniform(k, shape, jnp.float32, -s, s)
    return {
        "embedding": jax.random.normal(ks[0], (vocab_size, hidden), jnp.float32),
        # Stored transposed so kernels do x @ W^T directly.
        "w_ih0_t": u(ks[1], (hidden, 3 * hidden)),
        "w_hh0_t": u(ks[2], (hidden, 3 * hidden)),
        "b_ih0":   u(ks[3], (1, 3 * hidden)),
        "b_hh0":   u(ks[4], (1, 3 * hidden)),
        "w_ih1_t": u(ks[5], (hidden, 3 * hidden)),
        "w_hh1_t": u(ks[6], (hidden, 3 * hidden)),
        "b_ih1":   u(ks[7], (1, 3 * hidden)),
        "b_hh1":   u(ks[8], (1, 3 * hidden)),
        "w_lin_t": u(ks[9], (hidden, 1)),
        "b_lin":   u(ks[10], (1, 1)),
    }


if __name__ == "__main__":
    vocab_size = 20
    seq_len = 8
    batch = 8
    hidden = 32

    key = jax.random.PRNGKey(0)
    k_tok, k_h, k_par = jax.random.split(key, 3)

    x_tokens = jax.random.randint(k_tok, (seq_len, batch), 0, vocab_size, jnp.int32)
    h0 = jax.random.normal(k_h, (2, batch, hidden), jnp.float32)
    params = _init_params(k_par, vocab_size, hidden)

    out, h_out = gru_classifier_forward(x_tokens, h0, params, hidden=hidden)
    out = jax.block_until_ready(out)
    h_out = jax.block_until_ready(h_out)

    ref_out, ref_h = _reference_forward(x_tokens, h0, params, hidden=hidden)
    np.testing.assert_allclose(np.asarray(out), np.asarray(ref_out), rtol=1e-4, atol=2e-5)
    np.testing.assert_allclose(np.asarray(h_out), np.asarray(ref_h), rtol=1e-4, atol=2e-5)

    print("KERNEL_OK")
</pallas_src>

<mosaic_0001>
module attributes {stable_mosaic.version = 11 : i64} {
  func.func @_gru_classifier_kernel(%arg0: memref<64x32xf32, #tpu.memory_space<vmem>>, %arg1: memref<2x8x32xf32, #tpu.memory_space<vmem>>, %arg2: memref<32x96xf32, #tpu.memory_space<vmem>>, %arg3: memref<32x96xf32, #tpu.memory_space<vmem>>, %arg4: memref<1x96xf32, #tpu.memory_space<vmem>>, %arg5: memref<1x96xf32, #tpu.memory_space<vmem>>, %arg6: memref<64x192xf32, #tpu.memory_space<vmem>>, %arg7: memref<1x192xf32, #tpu.memory_space<vmem>>, %arg8: memref<32x1xf32, #tpu.memory_space<vmem>>, %arg9: memref<1x1xf32, #tpu.memory_space<vmem>>, %arg10: memref<8x1xf32, #tpu.memory_space<vmem>>, %arg11: memref<2x8x32xf32, #tpu.memory_space<vmem>>) attributes {dimension_semantics = [], scalar_prefetch = 0 : i64, scratch_operands = 0 : i64, tpu.core_type = #tpu.core_type<tc>} {
    %c0 = arith.constant 0 : index
    %c0_0 = arith.constant 0 : index
    %0 = vector.load %arg0[%c0, %c0_0] : memref<64x32xf32, #tpu.memory_space<vmem>>, vector<64x32xf32>
    %c0_1 = arith.constant 0 : index
    %c0_2 = arith.constant 0 : index
    %1 = vector.load %arg2[%c0_1, %c0_2] : memref<32x96xf32, #tpu.memory_space<vmem>>, vector<32x96xf32>
    %cst = arith.constant dense<0.000000e+00> : vector<64x96xf32>
    %2 = tpu.matmul %0, %1, %cst {dimension_numbers = #tpu.dot_dimension_numbers<[1], [0], [0], [1], [0, 0, 1, 1], [], []>} : vector<64x32xf32>, vector<32x96xf32>, vector<64x96xf32> -> vector<64x96xf32>
    %c0_3 = arith.constant 0 : index
    %c0_4 = arith.constant 0 : index
    %3 = vector.load %arg4[%c0_3, %c0_4] : memref<1x96xf32, #tpu.memory_space<vmem>>, vector<1x96xf32>
    %4 = vector.broadcast %3 : vector<1x96xf32> to vector<64x96xf32>
    %5 = arith.addf %2, %4 : vector<64x96xf32>
    %c0_5 = arith.constant 0 : index
    %c0_6 = arith.constant 0 : index
    %6 = vector.load %arg3[%c0_5, %c0_6] : memref<32x96xf32, #tpu.memory_space<vmem>>, vector<32x96xf32>
    %c0_7 = arith.constant 0 : index
    %c0_8 = arith.constant 0 : index
    %7 = vector.load %arg5[%c0_7, %c0_8] : memref<1x96xf32, #tpu.memory_space<vmem>>, vector<1x96xf32>
    %c0_9 = arith.constant 0 : index
    %c0_10 = arith.constant 0 : index
    %8 = vector.load %arg6[%c0_9, %c0_10] : memref<64x192xf32, #tpu.memory_space<vmem>>, vector<64x192xf32>
    %c0_11 = arith.constant 0 : index
    %c0_12 = arith.constant 0 : index
    %9 = vector.load %arg7[%c0_11, %c0_12] : memref<1x192xf32, #tpu.memory_space<vmem>>, vector<1x192xf32>
    %c0_13 = arith.constant 0 : index
    %c0_14 = arith.constant 0 : index
    %c0_15 = arith.constant 0 : index
    %10 = vector.load %arg1[%c0_13, %c0_14, %c0_15] : memref<2x8x32xf32, #tpu.memory_space<vmem>>, vector<1x8x32xf32>
    %11 = vector.shape_cast %10 : vector<1x8x32xf32> to vector<8x32xf32>
    %c1 = arith.constant 1 : index
    %c0_16 = arith.constant 0 : index
    %c0_17 = arith.constant 0 : index
    %12 = vector.load %arg1[%c1, %c0_16, %c0_17] : memref<2x8x32xf32, #tpu.memory_space<vmem>>, vector<1x8x32xf32>
    %13 = vector.shape_cast %12 : vector<1x8x32xf32> to vector<8x32xf32>
    %14 = vector.extract_strided_slice %5 {offsets = [0, 0], sizes = [8, 96], strides = [1, 1]} : vector<64x96xf32> to vector<8x96xf32>
    %cst_18 = arith.constant dense<0.000000e+00> : vector<8x96xf32>
    %15 = tpu.matmul %11, %6, %cst_18 {dimension_numbers = #tpu.dot_dimension_numbers<[1], [0], [0], [1], [0, 0, 1, 1], [], []>} : vector<8x32xf32>, vector<32x96xf32>, vector<8x96xf32> -> vector<8x96xf32>
    %16 = vector.broadcast %7 : vector<1x96xf32> to vector<8x96xf32>
    %17 = arith.addf %15, %16 : vector<8x96xf32>
    %18 = vector.extract_strided_slice %14 {offsets = [0, 0], sizes = [8, 32], strides = [1, 1]} : vector<8x96xf32> to vector<8x32xf32>
    %19 = vector.extract_strided_slice %17 {offsets = [0, 0], sizes = [8, 32], strides = [1, 1]} : vector<8x96xf32> to vector<8x32xf32>
    %20 = arith.addf %18, %19 : vector<8x32xf32>
    %21 = arith.negf %20 : vector<8x32xf32>
    %22 = math.exp %21 : vector<8x32xf32>
    %cst_19 = arith.constant 1.000000e+00 : f32
    %23 = vector.broadcast %cst_19 : f32 to vector<8x32xf32>
    %24 = arith.addf %23, %22 : vector<8x32xf32>
    %25 = arith.divf %23, %24 : vector<8x32xf32>
    %26 = vector.extract_strided_slice %14 {offsets = [0, 32], sizes = [8, 32], strides = [1, 1]} : vector<8x96xf32> to vector<8x32xf32>
    %27 = vector.extract_strided_slice %17 {offsets = [0, 32], sizes = [8, 32], strides = [1, 1]} : vector<8x96xf32> to vector<8x32xf32>
    %28 = arith.addf %26, %27 : vector<8x32xf32>
    %29 = arith.negf %28 : vector<8x32xf32>
    %30 = math.exp %29 : vector<8x32xf32>
    %cst_20 = arith.constant 1.000000e+00 : f32
    %31 = vector.broadcast %cst_20 : f32 to vector<8x32xf32>
    %32 = arith.addf %31, %30 : vector<8x32xf32>
    %33 = arith.divf %31, %32 : vector<8x32xf32>
    %34 = vector.extract_strided_slice %14 {offsets = [0, 64], sizes = [8, 32], strides = [1, 1]} : vector<8x96xf32> to vector<8x32xf32>
    %35 = vector.extract_strided_slice %17 {offsets = [0, 64], sizes = [8, 32], strides = [1, 1]} : vector<8x96xf32> to vector<8x32xf32>
    %36 = arith.mulf %25, %35 : vector<8x32xf32>
    %37 = arith.addf %34, %36 : vector<8x32xf32>
    %38 = math.tanh %37 : vector<8x32xf32>
    %cst_21 = arith.constant 1.000000e+00 : f32
    %39 = vector.broadcast %cst_21 : f32 to vector<8x32xf32>
    %40 = arith.subf %39, %33 : vector<8x32xf32>
    %41 = arith.mulf %40, %38 : vector<8x32xf32>
    %42 = arith.mulf %33, %11 : vector<8x32xf32>
    %43 = arith.addf %41, %42 : vector<8x32xf32>
    %44 = tpu.concatenate %43, %13 in 1 : vector<8x32xf32>, vector<8x32xf32> -> vector<8x64xf32>
    %cst_22 = arith.constant dense<0.000000e+00> : vector<8x192xf32>
    %45 = tpu.matmul %44, %8, %cst_22 {dimension_numbers = #tpu.dot_dimension_numbers<[1], [0], [0], [1], [0, 0, 1, 1], [], []>} : vector<8x64xf32>, vector<64x192xf32>, vector<8x192xf32> -> vector<8x192xf32>
    %46 = vector.broadcast %9 : vector<1x192xf32> to vector<8x192xf32>
    %47 = arith.addf %45, %46 : vector<8x192xf32>
    %48 = vector.extract_strided_slice %47 {offsets = [0, 0], sizes = [8, 32], strides = [1, 1]} : vector<8x192xf32> to vector<8x32xf32>
    %49 = vector.extract_strided_slice %47 {offsets = [0, 96], sizes = [8, 32], strides = [1, 1]} : vector<8x192xf32> to vector<8x32xf32>
    %50 = arith.addf %48, %49 : vector<8x32xf32>
    %51 = arith.negf %50 : vector<8x32xf32>
    %52 = math.exp %51 : vector<8x32xf32>
    %cst_23 = arith.constant 1.000000e+00 : f32
    %53 = vector.broadcast %cst_23 : f32 to vector<8x32xf32>
    %54 = arith.addf %53, %52 : vector<8x32xf32>
    %55 = arith.divf %53, %54 : vector<8x32xf32>
    %56 = vector.extract_strided_slice %47 {offsets = [0, 32], sizes = [8, 32], strides = [1, 1]} : vector<8x192xf32> to vector<8x32xf32>
    %57 = vector.extract_strided_slice %47 {offsets = [0, 128], sizes = [8, 32], strides = [1, 1]} : vector<8x192xf32> to vector<8x32xf32>
    %58 = arith.addf %56, %57 : vector<8x32xf32>
    %59 = arith.negf %58 : vector<8x32xf32>
    %60 = math.exp %59 : vector<8x32xf32>
    %cst_24 = arith.constant 1.000000e+00 : f32
    %61 = vector.broadcast %cst_24 : f32 to vector<8x32xf32>
    %62 = arith.addf %61, %60 : vector<8x32xf32>
    %63 = arith.divf %61, %62 : vector<8x32xf32>
    %64 = vector.extract_strided_slice %47 {offsets = [0, 64], sizes = [8, 32], strides = [1, 1]} : vector<8x192xf32> to vector<8x32xf32>
    %65 = vector.extract_strided_slice %47 {offsets = [0, 160], sizes = [8, 32], strides = [1, 1]} : vector<8x192xf32> to vector<8x32xf32>
    %66 = arith.mulf %55, %65 : vector<8x32xf32>
    %67 = arith.addf %64, %66 : vector<8x32xf32>
    %68 = math.tanh %67 : vector<8x32xf32>
    %cst_25 = arith.constant 1.000000e+00 : f32
    %69 = vector.broadcast %cst_25 : f32 to vector<8x32xf32>
    %70 = arith.subf %69, %63 : vector<8x32xf32>
    %71 = arith.mulf %70, %68 : vector<8x32xf32>
    %72 = arith.mulf %63, %13 : vector<8x32xf32>
    %73 = arith.addf %71, %72 : vector<8x32xf32>
    %74 = vector.extract_strided_slice %5 {offsets = [8, 0], sizes = [8, 96], strides = [1, 1]} : vector<64x96xf32> to vector<8x96xf32>
    %cst_26 = arith.constant dense<0.000000e+00> : vector<8x96xf32>
    %75 = tpu.matmul %43, %6, %cst_26 {dimension_numbers = #tpu.dot_dimension_numbers<[1], [0], [0], [1], [0, 0, 1, 1], [], []>} : vector<8x32xf32>, vector<32x96xf32>, vector<8x96xf32> -> vector<8x96xf32>
    %76 = vector.broadcast %7 : vector<1x96xf32> to vector<8x96xf32>
    %77 = arith.addf %75, %76 : vector<8x96xf32>
    %78 = vector.extract_strided_slice %74 {offsets = [0, 0], sizes = [8, 32], strides = [1, 1]} : vector<8x96xf32> to vector<8x32xf32>
    %79 = vector.extract_strided_slice %77 {offsets = [0, 0], sizes = [8, 32], strides = [1, 1]} : vector<8x96xf32> to vector<8x32xf32>
    %80 = arith.addf %78, %79 : vector<8x32xf32>
    %81 = arith.negf %80 : vector<8x32xf32>
    %82 = math.exp %81 : vector<8x32xf32>
    %cst_27 = arith.constant 1.000000e+00 : f32
    %83 = vector.broadcast %cst_27 : f32 to vector<8x32xf32>
    %84 = arith.addf %83, %82 : vector<8x32xf32>
    %85 = arith.divf %83, %84 : vector<8x32xf32>
    %86 = vector.extract_strided_slice %74 {offsets = [0, 32], sizes = [8, 32], strides = [1, 1]} : vector<8x96xf32> to vector<8x32xf32>
    %87 = vector.extract_strided_slice %77 {offsets = [0, 32], sizes = [8, 32], strides = [1, 1]} : vector<8x96xf32> to vector<8x32xf32>
    %88 = arith.addf %86, %87 : vector<8x32xf32>
    %89 = arith.negf %88 : vector<8x32xf32>
    %90 = math.exp %89 : vector<8x32xf32>
    %cst_28 = arith.constant 1.000000e+00 : f32
    %91 = vector.broadcast %cst_28 : f32 to vector<8x32xf32>
    %92 = arith.addf %91, %90 : vector<8x32xf32>
    %93 = arith.divf %91, %92 : vector<8x32xf32>
    %94 = vector.extract_strided_slice %74 {offsets = [0, 64], sizes = [8, 32], strides = [1, 1]} : vector<8x96xf32> to vector<8x32xf32>
    %95 = vector.extract_strided_slice %77 {offsets = [0, 64], sizes = [8, 32], strides = [1, 1]} : vector<8x96xf32> to vector<8x32xf32>
    %96 = arith.mulf %85, %95 : vector<8x32xf32>
    %97 = arith.addf %94, %96 : vector<8x32xf32>
    %98 = math.tanh %97 : vector<8x32xf32>
    %cst_29 = arith.constant 1.000000e+00 : f32
    %99 = vector.broadcast %cst_29 : f32 to vector<8x32xf32>
    %100 = arith.subf %99, %93 : vector<8x32xf32>
    %101 = arith.mulf %100, %98 : vector<8x32xf32>
    %102 = arith.mulf %93, %43 : vector<8x32xf32>
    %103 = arith.addf %101, %102 : vector<8x32xf32>
    %104 = tpu.concatenate %103, %73 in 1 : vector<8x32xf32>, vector<8x32xf32> -> vector<8x64xf32>
    %cst_30 = arith.constant dense<0.000000e+00> : vector<8x192xf32>
    %105 = tpu.matmul %104, %8, %cst_30 {dimension_numbers = #tpu.dot_dimension_numbers<[1], [0], [0], [1], [0, 0, 1, 1], [], []>} : vector<8x64xf32>, vector<64x192xf32>, vector<8x192xf32> -> vector<8x192xf32>
    %106 = vector.broadcast %9 : vector<1x192xf32> to vector<8x192xf32>
    %107 = arith.addf %105, %106 : vector<8x192xf32>
    %108 = vector.extract_strided_slice %107 {offsets = [0, 0], sizes = [8, 32], strides = [1, 1]} : vector<8x192xf32> to vector<8x32xf32>
    %109 = vector.extract_strided_slice %107 {offsets = [0, 96], sizes = [8, 32], strides = [1, 1]} : vector<8x192xf32> to vector<8x32xf32>
    %110 = arith.addf %108, %109 : vector<8x32xf32>
    %111 = arith.negf %110 : vector<8x32xf32>
    %112 = math.exp %111 : vector<8x32xf32>
    %cst_31 = arith.constant 1.000000e+00 : f32
    %113 = vector.broadcast %cst_31 : f32 to vector<8x32xf32>
    %114 = arith.addf %113, %112 : vector<8x32xf32>
    %115 = arith.divf %113, %114 : vector<8x32xf32>
    %116 = vector.extract_strided_slice %107 {offsets = [0, 32], sizes = [8, 32], strides = [1, 1]} : vector<8x192xf32> to vector<8x32xf32>
    %117 = vector.extract_strided_slice %107 {offsets = [0, 128], sizes = [8, 32], strides = [1, 1]} : vector<8x192xf32> to vector<8x32xf32>
    %118 = arith.addf %116, %117 : vector<8x32xf32>
    %119 = arith.negf %118 : vector<8x32xf32>
    %120 = math.exp %119 : vector<8x32xf32>
    %cst_32 = arith.constant 1.000000e+00 : f32
    %121 = vector.broadcast %cst_32 : f32 to vector<8x32xf32>
    %122 = arith.addf %121, %120 : vector<8x32xf32>
    %123 = arith.divf %121, %122 : vector<8x32xf32>
    %124 = vector.extract_strided_slice %107 {offsets = [0, 64], sizes = [8, 32], strides = [1, 1]} : vector<8x192xf32> to vector<8x32xf32>
    %125 = vector.extract_strided_slice %107 {offsets = [0, 160], sizes = [8, 32], strides = [1, 1]} : vector<8x192xf32> to vector<8x32xf32>
    %126 = arith.mulf %115, %125 : vector<8x32xf32>
    %127 = arith.addf %124, %126 : vector<8x32xf32>
    %128 = math.tanh %127 : vector<8x32xf32>
    %cst_33 = arith.constant 1.000000e+00 : f32
    %129 = vector.broadcast %cst_33 : f32 to vector<8x32xf32>
    %130 = arith.subf %129, %123 : vector<8x32xf32>
    %131 = arith.mulf %130, %128 : vector<8x32xf32>
    %132 = arith.mulf %123, %73 : vector<8x32xf32>
    %133 = arith.addf %131, %132 : vector<8x32xf32>
    %134 = vector.extract_strided_slice %5 {offsets = [16, 0], sizes = [8, 96], strides = [1, 1]} : vector<64x96xf32> to vector<8x96xf32>
    %cst_34 = arith.constant dense<0.000000e+00> : vector<8x96xf32>
    %135 = tpu.matmul %103, %6, %cst_34 {dimension_numbers = #tpu.dot_dimension_numbers<[1], [0], [0], [1], [0, 0, 1, 1], [], []>} : vector<8x32xf32>, vector<32x96xf32>, vector<8x96xf32> -> vector<8x96xf32>
    %136 = vector.broadcast %7 : vector<1x96xf32> to vector<8x96xf32>
    %137 = arith.addf %135, %136 : vector<8x96xf32>
    %138 = vector.extract_strided_slice %134 {offsets = [0, 0], sizes = [8, 32], strides = [1, 1]} : vector<8x96xf32> to vector<8x32xf32>
    %139 = vector.extract_strided_slice %137 {offsets = [0, 0], sizes = [8, 32], strides = [1, 1]} : vector<8x96xf32> to vector<8x32xf32>
    %140 = arith.addf %138, %139 : vector<8x32xf32>
    %141 = arith.negf %140 : vector<8x32xf32>
    %142 = math.exp %141 : vector<8x32xf32>
    %cst_35 = arith.constant 1.000000e+00 : f32
    %143 = vector.broadcast %cst_35 : f32 to vector<8x32xf32>
    %144 = arith.addf %143, %142 : vector<8x32xf32>
    %145 = arith.divf %143, %144 : vector<8x32xf32>
    %146 = vector.extract_strided_slice %134 {offsets = [0, 32], sizes = [8, 32], strides = [1, 1]} : vector<8x96xf32> to vector<8x32xf32>
    %147 = vector.extract_strided_slice %137 {offsets = [0, 32], sizes = [8, 32], strides = [1, 1]} : vector<8x96xf32> to vector<8x32xf32>
    %148 = arith.addf %146, %147 : vector<8x32xf32>
    %149 = arith.negf %148 : vector<8x32xf32>
    %150 = math.exp %149 : vector<8x32xf32>
    %cst_36 = arith.constant 1.000000e+00 : f32
    %151 = vector.broadcast %cst_36 : f32 to vector<8x32xf32>
    %152 = arith.addf %151, %150 : vector<8x32xf32>
    %153 = arith.divf %151, %152 : vector<8x32xf32>
    %154 = vector.extract_strided_slice %134 {offsets = [0, 64], sizes = [8, 32], strides = [1, 1]} : vector<8x96xf32> to vector<8x32xf32>
    %155 = vector.extract_strided_slice %137 {offsets = [0, 64], sizes = [8, 32], strides = [1, 1]} : vector<8x96xf32> to vector<8x32xf32>
    %156 = arith.mulf %145, %155 : vector<8x32xf32>
    %157 = arith.addf %154, %156 : vector<8x32xf32>
    %158 = math.tanh %157 : vector<8x32xf32>
    %cst_37 = arith.constant 1.000000e+00 : f32
    %159 = vector.broadcast %cst_37 : f32 to vector<8x32xf32>
    %160 = arith.subf %159, %153 : vector<8x32xf32>
    %161 = arith.mulf %160, %158 : vector<8x32xf32>
    %162 = arith.mulf %153, %103 : vector<8x32xf32>
    %163 = arith.addf %161, %162 : vector<8x32xf32>
    %164 = tpu.concatenate %163, %133 in 1 : vector<8x32xf32>, vector<8x32xf32> -> vector<8x64xf32>
    %cst_38 = arith.constant dense<0.000000e+00> : vector<8x192xf32>
    %165 = tpu.matmul %164, %8, %cst_38 {dimension_numbers = #tpu.dot_dimension_numbers<[1], [0], [0], [1], [0, 0, 1, 1], [], []>} : vector<8x64xf32>, vector<64x192xf32>, vector<8x192xf32> -> vector<8x192xf32>
    %166 = vector.broadcast %9 : vector<1x192xf32> to vector<8x192xf32>
    %167 = arith.addf %165, %166 : vector<8x192xf32>
    %168 = vector.extract_strided_slice %167 {offsets = [0, 0], sizes = [8, 32], strides = [1, 1]} : vector<8x192xf32> to vector<8x32xf32>
    %169 = vector.extract_strided_slice %167 {offsets = [0, 96], sizes = [8, 32], strides = [1, 1]} : vector<8x192xf32> to vector<8x32xf32>
    %170 = arith.addf %168, %169 : vector<8x32xf32>
    %171 = arith.negf %170 : vector<8x32xf32>
    %172 = math.exp %171 : vector<8x32xf32>
    %cst_39 = arith.constant 1.000000e+00 : f32
    %173 = vector.broadcast %cst_39 : f32 to vector<8x32xf32>
    %174 = arith.addf %173, %172 : vector<8x32xf32>
    %175 = arith.divf %173, %174 : vector<8x32xf32>
    %176 = vector.extract_strided_slice %167 {offsets = [0, 32], sizes = [8, 32], strides = [1, 1]} : vector<8x192xf32> to vector<8x32xf32>
    %177 = vector.extract_strided_slice %167 {offsets = [0, 128], sizes = [8, 32], strides = [1, 1]} : vector<8x192xf32> to vector<8x32xf32>
    %178 = arith.addf %176, %177 : vector<8x32xf32>
    %179 = arith.negf %178 : vector<8x32xf32>
    %180 = math.exp %179 : vector<8x32xf32>
    %cst_40 = arith.constant 1.000000e+00 : f32
    %181 = vector.broadcast %cst_40 : f32 to vector<8x32xf32>
    %182 = arith.addf %181, %180 : vector<8x32xf32>
    %183 = arith.divf %181, %182 : vector<8x32xf32>
    %184 = vector.extract_strided_slice %167 {offsets = [0, 64], sizes = [8, 32], strides = [1, 1]} : vector<8x192xf32> to vector<8x32xf32>
    %185 = vector.extract_strided_slice %167 {offsets = [0, 160], sizes = [8, 32], strides = [1, 1]} : vector<8x192xf32> to vector<8x32xf32>
    %186 = arith.mulf %175, %185 : vector<8x32xf32>
    %187 = arith.addf %184, %186 : vector<8x32xf32>
    %188 = math.tanh %187 : vector<8x32xf32>
    %cst_41 = arith.constant 1.000000e+00 : f32
    %189 = vector.broadcast %cst_41 : f32 to vector<8x32xf32>
    %190 = arith.subf %189, %183 : vector<8x32xf32>
    %191 = arith.mulf %190, %188 : vector<8x32xf32>
    %192 = arith.mulf %183, %133 : vector<8x32xf32>
    %193 = arith.addf %191, %192 : vector<8x32xf32>
    %194 = vector.extract_strided_slice %5 {offsets = [24, 0], sizes = [8, 96], strides = [1, 1]} : vector<64x96xf32> to vector<8x96xf32>
    %cst_42 = arith.constant dense<0.000000e+00> : vector<8x96xf32>
    %195 = tpu.matmul %163, %6, %cst_42 {dimension_numbers = #tpu.dot_dimension_numbers<[1], [0], [0], [1], [0, 0, 1, 1], [], []>} : vector<8x32xf32>, vector<32x96xf32>, vector<8x96xf32> -> vector<8x96xf32>
    %196 = vector.broadcast %7 : vector<1x96xf32> to vector<8x96xf32>
    %197 = arith.addf %195, %196 : vector<8x96xf32>
    %198 = vector.extract_strided_slice %194 {offsets = [0, 0], sizes = [8, 32], strides = [1, 1]} : vector<8x96xf32> to vector<8x32xf32>
    %199 = vector.extract_strided_slice %197 {offsets = [0, 0], sizes = [8, 32], strides = [1, 1]} : vector<8x96xf32> to vector<8x32xf32>
    %200 = arith.addf %198, %199 : vector<8x32xf32>
    %201 = arith.negf %200 : vector<8x32xf32>
    %202 = math.exp %201 : vector<8x32xf32>
    %cst_43 = arith.constant 1.000000e+00 : f32
    %203 = vector.broadcast %cst_43 : f32 to vector<8x32xf32>
    %204 = arith.addf %203, %202 : vector<8x32xf32>
    %205 = arith.divf %203, %204 : vector<8x32xf32>
    %206 = vector.extract_strided_slice %194 {offsets = [0, 32], sizes = [8, 32], strides = [1, 1]} : vector<8x96xf32> to vector<8x32xf32>
    %207 = vector.extract_strided_slice %197 {offsets = [0, 32], sizes = [8, 32], strides = [1, 1]} : vector<8x96xf32> to vector<8x32xf32>
    %208 = arith.addf %206, %207 : vector<8x32xf32>
    %209 = arith.negf %208 : vector<8x32xf32>
    %210 = math.exp %209 : vector<8x32xf32>
    %cst_44 = arith.constant 1.000000e+00 : f32
    %211 = vector.broadcast %cst_44 : f32 to vector<8x32xf32>
    %212 = arith.addf %211, %210 : vector<8x32xf32>
    %213 = arith.divf %211, %212 : vector<8x32xf32>
    %214 = vector.extract_strided_slice %194 {offsets = [0, 64], sizes = [8, 32], strides = [1, 1]} : vector<8x96xf32> to vector<8x32xf32>
    %215 = vector.extract_strided_slice %197 {offsets = [0, 64], sizes = [8, 32], strides = [1, 1]} : vector<8x96xf32> to vector<8x32xf32>
    %216 = arith.mulf %205, %215 : vector<8x32xf32>
    %217 = arith.addf %214, %216 : vector<8x32xf32>
    %218 = math.tanh %217 : vector<8x32xf32>
    %cst_45 = arith.constant 1.000000e+00 : f32
    %219 = vector.broadcast %cst_45 : f32 to vector<8x32xf32>
    %220 = arith.subf %219, %213 : vector<8x32xf32>
    %221 = arith.mulf %220, %218 : vector<8x32xf32>
    %222 = arith.mulf %213, %163 : vector<8x32xf32>
    %223 = arith.addf %221, %222 : vector<8x32xf32>
    %224 = tpu.concatenate %223, %193 in 1 : vector<8x32xf32>, vector<8x32xf32> -> vector<8x64xf32>
    %cst_46 = arith.constant dense<0.000000e+00> : vector<8x192xf32>
    %225 = tpu.matmul %224, %8, %cst_46 {dimension_numbers = #tpu.dot_dimension_numbers<[1], [0], [0], [1], [0, 0, 1, 1], [], []>} : vector<8x64xf32>, vector<64x192xf32>, vector<8x192xf32> -> vector<8x192xf32>
    %226 = vector.broadcast %9 : vector<1x192xf32> to vector<8x192xf32>
    %227 = arith.addf %225, %226 : vector<8x192xf32>
    %228 = vector.extract_strided_slice %227 {offsets = [0, 0], sizes = [8, 32], strides = [1, 1]} : vector<8x192xf32> to vector<8x32xf32>
    %229 = vector.extract_strided_slice %227 {offsets = [0, 96], sizes = [8, 32], strides = [1, 1]} : vector<8x192xf32> to vector<8x32xf32>
    %230 = arith.addf %228, %229 : vector<8x32xf32>
    %231 = arith.negf %230 : vector<8x32xf32>
    %232 = math.exp %231 : vector<8x32xf32>
    %cst_47 = arith.constant 1.000000e+00 : f32
    %233 = vector.broadcast %cst_47 : f32 to vector<8x32xf32>
    %234 = arith.addf %233, %232 : vector<8x32xf32>
    %235 = arith.divf %233, %234 : vector<8x32xf32>
    %236 = vector.extract_strided_slice %227 {offsets = [0, 32], sizes = [8, 32], strides = [1, 1]} : vector<8x192xf32> to vector<8x32xf32>
    %237 = vector.extract_strided_slice %227 {offsets = [0, 128], sizes = [8, 32], strides = [1, 1]} : vector<8x192xf32> to vector<8x32xf32>
    %238 = arith.addf %236, %237 : vector<8x32xf32>
    %239 = arith.negf %238 : vector<8x32xf32>
    %240 = math.exp %239 : vector<8x32xf32>
    %cst_48 = arith.constant 1.000000e+00 : f32
    %241 = vector.broadcast %cst_48 : f32 to vector<8x32xf32>
    %242 = arith.addf %241, %240 : vector<8x32xf32>
    %243 = arith.divf %241, %242 : vector<8x32xf32>
    %244 = vector.extract_strided_slice %227 {offsets = [0, 64], sizes = [8, 32], strides = [1, 1]} : vector<8x192xf32> to vector<8x32xf32>
    %245 = vector.extract_strided_slice %227 {offsets = [0, 160], sizes = [8, 32], strides = [1, 1]} : vector<8x192xf32> to vector<8x32xf32>
    %246 = arith.mulf %235, %245 : vector<8x32xf32>
    %247 = arith.addf %244, %246 : vector<8x32xf32>
    %248 = math.tanh %247 : vector<8x32xf32>
    %cst_49 = arith.constant 1.000000e+00 : f32
    %249 = vector.broadcast %cst_49 : f32 to vector<8x32xf32>
    %250 = arith.subf %249, %243 : vector<8x32xf32>
    %251 = arith.mulf %250, %248 : vector<8x32xf32>
    %252 = arith.mulf %243, %193 : vector<8x32xf32>
    %253 = arith.addf %251, %252 : vector<8x32xf32>
    %254 = vector.extract_strided_slice %5 {offsets = [32, 0], sizes = [8, 96], strides = [1, 1]} : vector<64x96xf32> to vector<8x96xf32>
    %cst_50 = arith.constant dense<0.000000e+00> : vector<8x96xf32>
    %255 = tpu.matmul %223, %6, %cst_50 {dimension_numbers = #tpu.dot_dimension_numbers<[1], [0], [0], [1], [0, 0, 1, 1], [], []>} : vector<8x32xf32>, vector<32x96xf32>, vector<8x96xf32> -> vector<8x96xf32>
    %256 = vector.broadcast %7 : vector<1x96xf32> to vector<8x96xf32>
    %257 = arith.addf %255, %256 : vector<8x96xf32>
    %258 = vector.extract_strided_slice %254 {offsets = [0, 0], sizes = [8, 32], strides = [1, 1]} : vector<8x96xf32> to vector<8x32xf32>
    %259 = vector.extract_strided_slice %257 {offsets = [0, 0], sizes = [8, 32], strides = [1, 1]} : vector<8x96xf32> to vector<8x32xf32>
    %260 = arith.addf %258, %259 : vector<8x32xf32>
    %261 = arith.negf %260 : vector<8x32xf32>
    %262 = math.exp %261 : vector<8x32xf32>
    %cst_51 = arith.constant 1.000000e+00 : f32
    %263 = vector.broadcast %cst_51 : f32 to vector<8x32xf32>
    %264 = arith.addf %263, %262 : vector<8x32xf32>
    %265 = arith.divf %263, %264 : vector<8x32xf32>
    %266 = vector.extract_strided_slice %254 {offsets = [0, 32], sizes = [8, 32], strides = [1, 1]} : vector<8x96xf32> to vector<8x32xf32>
    %267 = vector.extract_strided_slice %257 {offsets = [0, 32], sizes = [8, 32], strides = [1, 1]} : vector<8x96xf32> to vector<8x32xf32>
    %268 = arith.addf %266, %267 : vector<8x32xf32>
    %269 = arith.negf %268 : vector<8x32xf32>
    %270 = math.exp %269 : vector<8x32xf32>
    %cst_52 = arith.constant 1.000000e+00 : f32
    %271 = vector.broadcast %cst_52 : f32 to vector<8x32xf32>
    %272 = arith.addf %271, %270 : vector<8x32xf32>
    %273 = arith.divf %271, %272 : vector<8x32xf32>
    %274 = vector.extract_strided_slice %254 {offsets = [0, 64], sizes = [8, 32], strides = [1, 1]} : vector<8x96xf32> to vector<8x32xf32>
    %275 = vector.extract_strided_slice %257 {offsets = [0, 64], sizes = [8, 32], strides = [1, 1]} : vector<8x96xf32> to vector<8x32xf32>
    %276 = arith.mulf %265, %275 : vector<8x32xf32>
    %277 = arith.addf %274, %276 : vector<8x32xf32>
    %278 = math.tanh %277 : vector<8x32xf32>
    %cst_53 = arith.constant 1.000000e+00 : f32
    %279 = vector.broadcast %cst_53 : f32 to vector<8x32xf32>
    %280 = arith.subf %279, %273 : vector<8x32xf32>
    %281 = arith.mulf %280, %278 : vector<8x32xf32>
    %282 = arith.mulf %273, %223 : vector<8x32xf32>
    %283 = arith.addf %281, %282 : vector<8x32xf32>
    %284 = tpu.concatenate %283, %253 in 1 : vector<8x32xf32>, vector<8x32xf32> -> vector<8x64xf32>
    %cst_54 = arith.constant dense<0.000000e+00> : vector<8x192xf32>
    %285 = tpu.matmul %284, %8, %cst_54 {dimension_numbers = #tpu.dot_dimension_numbers<[1], [0], [0], [1], [0, 0, 1, 1], [], []>} : vector<8x64xf32>, vector<64x192xf32>, vector<8x192xf32> -> vector<8x192xf32>
    %286 = vector.broadcast %9 : vector<1x192xf32> to vector<8x192xf32>
    %287 = arith.addf %285, %286 : vector<8x192xf32>
    %288 = vector.extract_strided_slice %287 {offsets = [0, 0], sizes = [8, 32], strides = [1, 1]} : vector<8x192xf32> to vector<8x32xf32>
    %289 = vector.extract_strided_slice %287 {offsets = [0, 96], sizes = [8, 32], strides = [1, 1]} : vector<8x192xf32> to vector<8x32xf32>
    %290 = arith.addf %288, %289 : vector<8x32xf32>
    %291 = arith.negf %290 : vector<8x32xf32>
    %292 = math.exp %291 : vector<8x32xf32>
    %cst_55 = arith.constant 1.000000e+00 : f32
    %293 = vector.broadcast %cst_55 : f32 to vector<8x32xf32>
    %294 = arith.addf %293, %292 : vector<8x32xf32>
    %295 = arith.divf %293, %294 : vector<8x32xf32>
    %296 = vector.extract_strided_slice %287 {offsets = [0, 32], sizes = [8, 32], strides = [1, 1]} : vector<8x192xf32> to vector<8x32xf32>
    %297 = vector.extract_strided_slice %287 {offsets = [0, 128], sizes = [8, 32], strides = [1, 1]} : vector<8x192xf32> to vector<8x32xf32>
    %298 = arith.addf %296, %297 : vector<8x32xf32>
    %299 = arith.negf %298 : vector<8x32xf32>
    %300 = math.exp %299 : vector<8x32xf32>
    %cst_56 = arith.constant 1.000000e+00 : f32
    %301 = vector.broadcast %cst_56 : f32 to vector<8x32xf32>
    %302 = arith.addf %301, %300 : vector<8x32xf32>
    %303 = arith.divf %301, %302 : vector<8x32xf32>
    %304 = vector.extract_strided_slice %287 {offsets = [0, 64], sizes = [8, 32], strides = [1, 1]} : vector<8x192xf32> to vector<8x32xf32>
    %305 = vector.extract_strided_slice %287 {offsets = [0, 160], sizes = [8, 32], strides = [1, 1]} : vector<8x192xf32> to vector<8x32xf32>
    %306 = arith.mulf %295, %305 : vector<8x32xf32>
    %307 = arith.addf %304, %306 : vector<8x32xf32>
    %308 = math.tanh %307 : vector<8x32xf32>
    %cst_57 = arith.constant 1.000000e+00 : f32
    %309 = vector.broadcast %cst_57 : f32 to vector<8x32xf32>
    %310 = arith.subf %309, %303 : vector<8x32xf32>
    %311 = arith.mulf %310, %308 : vector<8x32xf32>
    %312 = arith.mulf %303, %253 : vector<8x32xf32>
    %313 = arith.addf %311, %312 : vector<8x32xf32>
    %314 = vector.extract_strided_slice %5 {offsets = [40, 0], sizes = [8, 96], strides = [1, 1]} : vector<64x96xf32> to vector<8x96xf32>
    %cst_58 = arith.constant dense<0.000000e+00> : vector<8x96xf32>
    %315 = tpu.matmul %283, %6, %cst_58 {dimension_numbers = #tpu.dot_dimension_numbers<[1], [0], [0], [1], [0, 0, 1, 1], [], []>} : vector<8x32xf32>, vector<32x96xf32>, vector<8x96xf32> -> vector<8x96xf32>
    %316 = vector.broadcast %7 : vector<1x96xf32> to vector<8x96xf32>
    %317 = arith.addf %315, %316 : vector<8x96xf32>
    %318 = vector.extract_strided_slice %314 {offsets = [0, 0], sizes = [8, 32], strides = [1, 1]} : vector<8x96xf32> to vector<8x32xf32>
    %319 = vector.extract_strided_slice %317 {offsets = [0, 0], sizes = [8, 32], strides = [1, 1]} : vector<8x96xf32> to vector<8x32xf32>
    %320 = arith.addf %318, %319 : vector<8x32xf32>
    %321 = arith.negf %320 : vector<8x32xf32>
    %322 = math.exp %321 : vector<8x32xf32>
    %cst_59 = arith.constant 1.000000e+00 : f32
    %323 = vector.broadcast %cst_59 : f32 to vector<8x32xf32>
    %324 = arith.addf %323, %322 : vector<8x32xf32>
    %325 = arith.divf %323, %324 : vector<8x32xf32>
    %326 = vector.extract_strided_slice %314 {offsets = [0, 32], sizes = [8, 32], strides = [1, 1]} : vector<8x96xf32> to vector<8x32xf32>
    %327 = vector.extract_strided_slice %317 {offsets = [0, 32], sizes = [8, 32], strides = [1, 1]} : vector<8x96xf32> to vector<8x32xf32>
    %328 = arith.addf %326, %327 : vector<8x32xf32>
    %329 = arith.negf %328 : vector<8x32xf32>
    %330 = math.exp %329 : vector<8x32xf32>
    %cst_60 = arith.constant 1.000000e+00 : f32
    %331 = vector.broadcast %cst_60 : f32 to vector<8x32xf32>
    %332 = arith.addf %331, %330 : vector<8x32xf32>
    %333 = arith.divf %331, %332 : vector<8x32xf32>
    %334 = vector.extract_strided_slice %314 {offsets = [0, 64], sizes = [8, 32], strides = [1, 1]} : vector<8x96xf32> to vector<8x32xf32>
    %335 = vector.extract_strided_slice %317 {offsets = [0, 64], sizes = [8, 32], strides = [1, 1]} : vector<8x96xf32> to vector<8x32xf32>
    %336 = arith.mulf %325, %335 : vector<8x32xf32>
    %337 = arith.addf %334, %336 : vector<8x32xf32>
    %338 = math.tanh %337 : vector<8x32xf32>
    %cst_61 = arith.constant 1.000000e+00 : f32
    %339 = vector.broadcast %cst_61 : f32 to vector<8x32xf32>
    %340 = arith.subf %339, %333 : vector<8x32xf32>
    %341 = arith.mulf %340, %338 : vector<8x32xf32>
    %342 = arith.mulf %333, %283 : vector<8x32xf32>
    %343 = arith.addf %341, %342 : vector<8x32xf32>
    %344 = tpu.concatenate %343, %313 in 1 : vector<8x32xf32>, vector<8x32xf32> -> vector<8x64xf32>
    %cst_62 = arith.constant dense<0.000000e+00> : vector<8x192xf32>
    %345 = tpu.matmul %344, %8, %cst_62 {dimension_numbers = #tpu.dot_dimension_numbers<[1], [0], [0], [1], [0, 0, 1, 1], [], []>} : vector<8x64xf32>, vector<64x192xf32>, vector<8x192xf32> -> vector<8x192xf32>
    %346 = vector.broadcast %9 : vector<1x192xf32> to vector<8x192xf32>
    %347 = arith.addf %345, %346 : vector<8x192xf32>
    %348 = vector.extract_strided_slice %347 {offsets = [0, 0], sizes = [8, 32], strides = [1, 1]} : vector<8x192xf32> to vector<8x32xf32>
    %349 = vector.extract_strided_slice %347 {offsets = [0, 96], sizes = [8, 32], strides = [1, 1]} : vector<8x192xf32> to vector<8x32xf32>
    %350 = arith.addf %348, %349 : vector<8x32xf32>
    %351 = arith.negf %350 : vector<8x32xf32>
    %352 = math.exp %351 : vector<8x32xf32>
    %cst_63 = arith.constant 1.000000e+00 : f32
    %353 = vector.broadcast %cst_63 : f32 to vector<8x32xf32>
    %354 = arith.addf %353, %352 : vector<8x32xf32>
    %355 = arith.divf %353, %354 : vector<8x32xf32>
    %356 = vector.extract_strided_slice %347 {offsets = [0, 32], sizes = [8, 32], strides = [1, 1]} : vector<8x192xf32> to vector<8x32xf32>
    %357 = vector.extract_strided_slice %347 {offsets = [0, 128], sizes = [8, 32], strides = [1, 1]} : vector<8x192xf32> to vector<8x32xf32>
    %358 = arith.addf %356, %357 : vector<8x32xf32>
    %359 = arith.negf %358 : vector<8x32xf32>
    %360 = math.exp %359 : vector<8x32xf32>
    %cst_64 = arith.constant 1.000000e+00 : f32
    %361 = vector.broadcast %cst_64 : f32 to vector<8x32xf32>
    %362 = arith.addf %361, %360 : vector<8x32xf32>
    %363 = arith.divf %361, %362 : vector<8x32xf32>
    %364 = vector.extract_strided_slice %347 {offsets = [0, 64], sizes = [8, 32], strides = [1, 1]} : vector<8x192xf32> to vector<8x32xf32>
    %365 = vector.extract_strided_slice %347 {offsets = [0, 160], sizes = [8, 32], strides = [1, 1]} : vector<8x192xf32> to vector<8x32xf32>
    %366 = arith.mulf %355, %365 : vector<8x32xf32>
    %367 = arith.addf %364, %366 : vector<8x32xf32>
    %368 = math.tanh %367 : vector<8x32xf32>
    %cst_65 = arith.constant 1.000000e+00 : f32
    %369 = vector.broadcast %cst_65 : f32 to vector<8x32xf32>
    %370 = arith.subf %369, %363 : vector<8x32xf32>
    %371 = arith.mulf %370, %368 : vector<8x32xf32>
    %372 = arith.mulf %363, %313 : vector<8x32xf32>
    %373 = arith.addf %371, %372 : vector<8x32xf32>
    %374 = vector.extract_strided_slice %5 {offsets = [48, 0], sizes = [8, 96], strides = [1, 1]} : vector<64x96xf32> to vector<8x96xf32>
    %cst_66 = arith.constant dense<0.000000e+00> : vector<8x96xf32>
    %375 = tpu.matmul %343, %6, %cst_66 {dimension_numbers = #tpu.dot_dimension_numbers<[1], [0], [0], [1], [0, 0, 1, 1], [], []>} : vector<8x32xf32>, vector<32x96xf32>, vector<8x96xf32> -> vector<8x96xf32>
    %376 = vector.broadcast %7 : vector<1x96xf32> to vector<8x96xf32>
    %377 = arith.addf %375, %376 : vector<8x96xf32>
    %378 = vector.extract_strided_slice %374 {offsets = [0, 0], sizes = [8, 32], strides = [1, 1]} : vector<8x96xf32> to vector<8x32xf32>
    %379 = vector.extract_strided_slice %377 {offsets = [0, 0], sizes = [8, 32], strides = [1, 1]} : vector<8x96xf32> to vector<8x32xf32>
    %380 = arith.addf %378, %379 : vector<8x32xf32>
    %381 = arith.negf %380 : vector<8x32xf32>
    %382 = math.exp %381 : vector<8x32xf32>
    %cst_67 = arith.constant 1.000000e+00 : f32
    %383 = vector.broadcast %cst_67 : f32 to vector<8x32xf32>
    %384 = arith.addf %383, %382 : vector<8x32xf32>
    %385 = arith.divf %383, %384 : vector<8x32xf32>
    %386 = vector.extract_strided_slice %374 {offsets = [0, 32], sizes = [8, 32], strides = [1, 1]} : vector<8x96xf32> to vector<8x32xf32>
    %387 = vector.extract_strided_slice %377 {offsets = [0, 32], sizes = [8, 32], strides = [1, 1]} : vector<8x96xf32> to vector<8x32xf32>
    %388 = arith.addf %386, %387 : vector<8x32xf32>
    %389 = arith.negf %388 : vector<8x32xf32>
    %390 = math.exp %389 : vector<8x32xf32>
    %cst_68 = arith.constant 1.000000e+00 : f32
    %391 = vector.broadcast %cst_68 : f32 to vector<8x32xf32>
    %392 = arith.addf %391, %390 : vector<8x32xf32>
    %393 = arith.divf %391, %392 : vector<8x32xf32>
    %394 = vector.extract_strided_slice %374 {offsets = [0, 64], sizes = [8, 32], strides = [1, 1]} : vector<8x96xf32> to vector<8x32xf32>
    %395 = vector.extract_strided_slice %377 {offsets = [0, 64], sizes = [8, 32], strides = [1, 1]} : vector<8x96xf32> to vector<8x32xf32>
    %396 = arith.mulf %385, %395 : vector<8x32xf32>
    %397 = arith.addf %394, %396 : vector<8x32xf32>
    %398 = math.tanh %397 : vector<8x32xf32>
    %cst_69 = arith.constant 1.000000e+00 : f32
    %399 = vector.broadcast %cst_69 : f32 to vector<8x32xf32>
    %400 = arith.subf %399, %393 : vector<8x32xf32>
    %401 = arith.mulf %400, %398 : vector<8x32xf32>
    %402 = arith.mulf %393, %343 : vector<8x32xf32>
    %403 = arith.addf %401, %402 : vector<8x32xf32>
    %404 = tpu.concatenate %403, %373 in 1 : vector<8x32xf32>, vector<8x32xf32> -> vector<8x64xf32>
    %cst_70 = arith.constant dense<0.000000e+00> : vector<8x192xf32>
    %405 = tpu.matmul %404, %8, %cst_70 {dimension_numbers = #tpu.dot_dimension_numbers<[1], [0], [0], [1], [0, 0, 1, 1], [], []>} : vector<8x64xf32>, vector<64x192xf32>, vector<8x192xf32> -> vector<8x192xf32>
    %406 = vector.broadcast %9 : vector<1x192xf32> to vector<8x192xf32>
    %407 = arith.addf %405, %406 : vector<8x192xf32>
    %408 = vector.extract_strided_slice %407 {offsets = [0, 0], sizes = [8, 32], strides = [1, 1]} : vector<8x192xf32> to vector<8x32xf32>
    %409 = vector.extract_strided_slice %407 {offsets = [0, 96], sizes = [8, 32], strides = [1, 1]} : vector<8x192xf32> to vector<8x32xf32>
    %410 = arith.addf %408, %409 : vector<8x32xf32>
    %411 = arith.negf %410 : vector<8x32xf32>
    %412 = math.exp %411 : vector<8x32xf32>
    %cst_71 = arith.constant 1.000000e+00 : f32
    %413 = vector.broadcast %cst_71 : f32 to vector<8x32xf32>
    %414 = arith.addf %413, %412 : vector<8x32xf32>
    %415 = arith.divf %413, %414 : vector<8x32xf32>
    %416 = vector.extract_strided_slice %407 {offsets = [0, 32], sizes = [8, 32], strides = [1, 1]} : vector<8x192xf32> to vector<8x32xf32>
    %417 = vector.extract_strided_slice %407 {offsets = [0, 128], sizes = [8, 32], strides = [1, 1]} : vector<8x192xf32> to vector<8x32xf32>
    %418 = arith.addf %416, %417 : vector<8x32xf32>
    %419 = arith.negf %418 : vector<8x32xf32>
    %420 = math.exp %419 : vector<8x32xf32>
    %cst_72 = arith.constant 1.000000e+00 : f32
    %421 = vector.broadcast %cst_72 : f32 to vector<8x32xf32>
    %422 = arith.addf %421, %420 : vector<8x32xf32>
    %423 = arith.divf %421, %422 : vector<8x32xf32>
    %424 = vector.extract_strided_slice %407 {offsets = [0, 64], sizes = [8, 32], strides = [1, 1]} : vector<8x192xf32> to vector<8x32xf32>
    %425 = vector.extract_strided_slice %407 {offsets = [0, 160], sizes = [8, 32], strides = [1, 1]} : vector<8x192xf32> to vector<8x32xf32>
    %426 = arith.mulf %415, %425 : vector<8x32xf32>
    %427 = arith.addf %424, %426 : vector<8x32xf32>
    %428 = math.tanh %427 : vector<8x32xf32>
    %cst_73 = arith.constant 1.000000e+00 : f32
    %429 = vector.broadcast %cst_73 : f32 to vector<8x32xf32>
    %430 = arith.subf %429, %423 : vector<8x32xf32>
    %431 = arith.mulf %430, %428 : vector<8x32xf32>
    %432 = arith.mulf %423, %373 : vector<8x32xf32>
    %433 = arith.addf %431, %432 : vector<8x32xf32>
    %434 = vector.extract_strided_slice %5 {offsets = [56, 0], sizes = [8, 96], strides = [1, 1]} : vector<64x96xf32> to vector<8x96xf32>
    %cst_74 = arith.constant dense<0.000000e+00> : vector<8x96xf32>
    %435 = tpu.matmul %403, %6, %cst_74 {dimension_numbers = #tpu.dot_dimension_numbers<[1], [0], [0], [1], [0, 0, 1, 1], [], []>} : vector<8x32xf32>, vector<32x96xf32>, vector<8x96xf32> -> vector<8x96xf32>
    %436 = vector.broadcast %7 : vector<1x96xf32> to vector<8x96xf32>
    %437 = arith.addf %435, %436 : vector<8x96xf32>
    %438 = vector.extract_strided_slice %434 {offsets = [0, 0], sizes = [8, 32], strides = [1, 1]} : vector<8x96xf32> to vector<8x32xf32>
    %439 = vector.extract_strided_slice %437 {offsets = [0, 0], sizes = [8, 32], strides = [1, 1]} : vector<8x96xf32> to vector<8x32xf32>
    %440 = arith.addf %438, %439 : vector<8x32xf32>
    %441 = arith.negf %440 : vector<8x32xf32>
    %442 = math.exp %441 : vector<8x32xf32>
    %cst_75 = arith.constant 1.000000e+00 : f32
    %443 = vector.broadcast %cst_75 : f32 to vector<8x32xf32>
    %444 = arith.addf %443, %442 : vector<8x32xf32>
    %445 = arith.divf %443, %444 : vector<8x32xf32>
    %446 = vector.extract_strided_slice %434 {offsets = [0, 32], sizes = [8, 32], strides = [1, 1]} : vector<8x96xf32> to vector<8x32xf32>
    %447 = vector.extract_strided_slice %437 {offsets = [0, 32], sizes = [8, 32], strides = [1, 1]} : vector<8x96xf32> to vector<8x32xf32>
    %448 = arith.addf %446, %447 : vector<8x32xf32>
    %449 = arith.negf %448 : vector<8x32xf32>
    %450 = math.exp %449 : vector<8x32xf32>
    %cst_76 = arith.constant 1.000000e+00 : f32
    %451 = vector.broadcast %cst_76 : f32 to vector<8x32xf32>
    %452 = arith.addf %451, %450 : vector<8x32xf32>
    %453 = arith.divf %451, %452 : vector<8x32xf32>
    %454 = vector.extract_strided_slice %434 {offsets = [0, 64], sizes = [8, 32], strides = [1, 1]} : vector<8x96xf32> to vector<8x32xf32>
    %455 = vector.extract_strided_slice %437 {offsets = [0, 64], sizes = [8, 32], strides = [1, 1]} : vector<8x96xf32> to vector<8x32xf32>
    %456 = arith.mulf %445, %455 : vector<8x32xf32>
    %457 = arith.addf %454, %456 : vector<8x32xf32>
    %458 = math.tanh %457 : vector<8x32xf32>
    %cst_77 = arith.constant 1.000000e+00 : f32
    %459 = vector.broadcast %cst_77 : f32 to vector<8x32xf32>
    %460 = arith.subf %459, %453 : vector<8x32xf32>
    %461 = arith.mulf %460, %458 : vector<8x32xf32>
    %462 = arith.mulf %453, %403 : vector<8x32xf32>
    %463 = arith.addf %461, %462 : vector<8x32xf32>
    %464 = tpu.concatenate %463, %433 in 1 : vector<8x32xf32>, vector<8x32xf32> -> vector<8x64xf32>
    %cst_78 = arith.constant dense<0.000000e+00> : vector<8x192xf32>
    %465 = tpu.matmul %464, %8, %cst_78 {dimension_numbers = #tpu.dot_dimension_numbers<[1], [0], [0], [1], [0, 0, 1, 1], [], []>} : vector<8x64xf32>, vector<64x192xf32>, vector<8x192xf32> -> vector<8x192xf32>
    %466 = vector.broadcast %9 : vector<1x192xf32> to vector<8x192xf32>
    %467 = arith.addf %465, %466 : vector<8x192xf32>
    %468 = vector.extract_strided_slice %467 {offsets = [0, 0], sizes = [8, 32], strides = [1, 1]} : vector<8x192xf32> to vector<8x32xf32>
    %469 = vector.extract_strided_slice %467 {offsets = [0, 96], sizes = [8, 32], strides = [1, 1]} : vector<8x192xf32> to vector<8x32xf32>
    %470 = arith.addf %468, %469 : vector<8x32xf32>
    %471 = arith.negf %470 : vector<8x32xf32>
    %472 = math.exp %471 : vector<8x32xf32>
    %cst_79 = arith.constant 1.000000e+00 : f32
    %473 = vector.broadcast %cst_79 : f32 to vector<8x32xf32>
    %474 = arith.addf %473, %472 : vector<8x32xf32>
    %475 = arith.divf %473, %474 : vector<8x32xf32>
    %476 = vector.extract_strided_slice %467 {offsets = [0, 32], sizes = [8, 32], strides = [1, 1]} : vector<8x192xf32> to vector<8x32xf32>
    %477 = vector.extract_strided_slice %467 {offsets = [0, 128], sizes = [8, 32], strides = [1, 1]} : vector<8x192xf32> to vector<8x32xf32>
    %478 = arith.addf %476, %477 : vector<8x32xf32>
    %479 = arith.negf %478 : vector<8x32xf32>
    %480 = math.exp %479 : vector<8x32xf32>
    %cst_80 = arith.constant 1.000000e+00 : f32
    %481 = vector.broadcast %cst_80 : f32 to vector<8x32xf32>
    %482 = arith.addf %481, %480 : vector<8x32xf32>
    %483 = arith.divf %481, %482 : vector<8x32xf32>
    %484 = vector.extract_strided_slice %467 {offsets = [0, 64], sizes = [8, 32], strides = [1, 1]} : vector<8x192xf32> to vector<8x32xf32>
    %485 = vector.extract_strided_slice %467 {offsets = [0, 160], sizes = [8, 32], strides = [1, 1]} : vector<8x192xf32> to vector<8x32xf32>
    %486 = arith.mulf %475, %485 : vector<8x32xf32>
    %487 = arith.addf %484, %486 : vector<8x32xf32>
    %488 = math.tanh %487 : vector<8x32xf32>
    %cst_81 = arith.constant 1.000000e+00 : f32
    %489 = vector.broadcast %cst_81 : f32 to vector<8x32xf32>
    %490 = arith.subf %489, %483 : vector<8x32xf32>
    %491 = arith.mulf %490, %488 : vector<8x32xf32>
    %492 = arith.mulf %483, %433 : vector<8x32xf32>
    %493 = arith.addf %491, %492 : vector<8x32xf32>
    %c0_82 = arith.constant 0 : index
    %c0_83 = arith.constant 0 : index
    %c0_84 = arith.constant 0 : index
    %494 = vector.load %arg11[%c0_82, %c0_83, %c0_84] : memref<2x8x32xf32, #tpu.memory_space<vmem>>, vector<1x8x32xf32>
    %495 = vector.shape_cast %494 : vector<1x8x32xf32> to vector<8x32xf32>
    %496 = vector.shape_cast %463 : vector<8x32xf32> to vector<1x8x32xf32>
    tpu.vector_store %arg11[%c0_82, %c0_83, %c0_84], %496 {strides = array<i32>} : memref<2x8x32xf32, #tpu.memory_space<vmem>>, vector<1x8x32xf32>,
    %c1_85 = arith.constant 1 : index
    %c0_86 = arith.constant 0 : index
    %c0_87 = arith.constant 0 : index
    %497 = vector.load %arg11[%c1_85, %c0_86, %c0_87] : memref<2x8x32xf32, #tpu.memory_space<vmem>>, vector<1x8x32xf32>
    %498 = vector.shape_cast %497 : vector<1x8x32xf32> to vector<8x32xf32>
    %499 = vector.shape_cast %493 : vector<8x32xf32> to vector<1x8x32xf32>
    tpu.vector_store %arg11[%c1_85, %c0_86, %c0_87], %499 {strides = array<i32>} : memref<2x8x32xf32, #tpu.memory_space<vmem>>, vector<1x8x32xf32>,
    %c0_88 = arith.constant 0 : index
    %c0_89 = arith.constant 0 : index
    %500 = vector.load %arg8[%c0_88, %c0_89] : memref<32x1xf32, #tpu.memory_space<vmem>>, vector<32x1xf32>
    %cst_90 = arith.constant dense<0.000000e+00> : vector<8x1xf32>
    %501 = tpu.matmul %493, %500, %cst_90 {dimension_numbers = #tpu.dot_dimension_numbers<[1], [0], [0], [1], [0, 0, 1, 1], [], []>} : vector<8x32xf32>, vector<32x1xf32>, vector<8x1xf32> -> vector<8x1xf32>
    %c0_91 = arith.constant 0 : index
    %c0_92 = arith.constant 0 : index
    %502 = vector.load %arg9[%c0_91, %c0_92] : memref<1x1xf32, #tpu.memory_space<vmem>>, vector<1x1xf32>
    %503 = vector.broadcast %502 : vector<1x1xf32> to vector<8x1xf32>
    %504 = arith.addf %501, %503 : vector<8x1xf32>
    %505 = arith.negf %504 : vector<8x1xf32>
    %506 = math.exp %505 : vector<8x1xf32>
    %cst_93 = arith.constant 1.000000e+00 : f32
    %507 = vector.broadcast %cst_93 : f32 to vector<8x1xf32>
    %508 = arith.addf %507, %506 : vector<8x1xf32>
    %509 = arith.divf %507, %508 : vector<8x1xf32>
    %c0_94 = arith.constant 0 : index
    %c0_95 = arith.constant 0 : index
    %510 = vector.load %arg10[%c0_94, %c0_95] : memref<8x1xf32, #tpu.memory_space<vmem>>, vector<8x1xf32>
    tpu.vector_store %arg10[%c0_94, %c0_95], %509 {strides = array<i32>} : memref<8x1xf32, #tpu.memory_space<vmem>>, vector<8x1xf32>,
    return
  }
}

</mosaic_0001>

<llo_original>
// kernel: tpu_custom_call.1
$region0: #{tpu_custom_call.1}
  #allocation0 [shape = 'u32[]', space=smem, size = 0x4, offset = 0x4, fixed_abs, tag = 'smem constant byte address 0x4 - core index']
  #allocation1 [shape = 'u32[72,128]{1,0:T(1,128)}', space=vmem, size = 0x9000, scoped, tag = 'internal scratch']
  #allocation2 [shape = 'f32[1,1]{1,0:T(1,128)S(1)}', space=vmem, size = 0x200, scoped, tag = 'scoped memory for tpu_custom_call.1']
  %s0 = inlined_call_operand.vmem [shape: f32[64,32], index: 0, kind: input, shape index: {}]
  %s1 = inlined_call_operand.vmem [shape: f32[2,8,32], index: 1, kind: input, shape index: {}]
  %s2 = inlined_call_operand.vmem [shape: f32[32,96], index: 2, kind: input, shape index: {}]
  %s3 = inlined_call_operand.vmem [shape: f32[32,96], index: 3, kind: input, shape index: {}]
  %s4 = inlined_call_operand.vmem [shape: f32[1,96], index: 4, kind: input, shape index: {}]
  %s5 = inlined_call_operand.vmem [shape: f32[1,96], index: 5, kind: input, shape index: {}]
  %s6 = inlined_call_operand.hbm [shape: f32[64,192], index: 6, kind: input, shape index: {}]
  %s7 = inlined_call_operand.vmem [shape: f32[1,192], index: 7, kind: input, shape index: {}]
  %s8 = inlined_call_operand.vmem [shape: f32[32,1], index: 8, kind: input, shape index: {}]
  %s9 = inlined_call_operand.<no memory space> [shape: f32[1,1], index: 9, kind: input, shape index: {}]
  %s10 = inlined_call_operand.vmem [shape: f32[8,1], index: 10, kind: output, shape index: {0}]
  %s11 = inlined_call_operand.hbm [shape: f32[2,8,32], index: 11, kind: output, shape index: {1}]
  %12 = xla_tuple %s10, %s11
  %s13 = sld [smem:[#allocation0]]
  $region62: #{tpu_custom_call.1} parent=0
    _
  %s15 = ssub.s32 1, %s13
  %s16 = scalar_select 0, %s15, %s13
  %v17 = vstv %s9
  %18 = vst [vmem:[#allocation2] sm:$0x1] %v17
  $region1: #{tpu_custom_call.1} parent=0
    #allocation3 [shape = 'u8[65536]{0}', space=vmem, size = 0x10000, scoped, tag = 'input window, operand 6, single buffered']
    #allocation4 [shape = 's32[1]{0}', space=sflag, size = 0x4, scoped, tag = 'scoped memory for tpu_custom_call.1']
    #allocation5 [shape = 's32[1]{0}', space=sflag, size = 0x4, scoped, tag = 'scoped memory for tpu_custom_call.1']
    #allocation6 [shape = 'u8[8192]{0}', space=vmem, size = 0x2000, scoped, tag = 'output window, operand 1, single buffered']
    %19 = vsyncpa [#allocation4], 0
    %20 = vsyncpa [#allocation5], 0
    // Predicated region
    $region2: #{tpu_custom_call.1} parent=1 // pred_check
      _
    $region3: #{tpu_custom_call.1} parent=1 // pred_check_branch
      %22 = sbr.rel (0) target = $region5
    $region4: #{tpu_custom_call.1} parent=1 // pred_region
      _
    $region5: #{tpu_custom_call.1} parent=1 // pred_fallthru
      _
    // Predicated region
    $region6: #{tpu_custom_call.1} parent=1 // pred_check
      _
    $region7: #{tpu_custom_call.1} parent=1 // pred_check_branch
      %24 = sbr.rel (0) target = $region9
    $region8: #{tpu_custom_call.1} parent=1 // pred_region
      _
    $region9: #{tpu_custom_call.1} parent=1 // pred_fallthru
      _
    // Predicated region
    $region10: #{tpu_custom_call.1} parent=1 // pred_check
      _
    $region11: #{tpu_custom_call.1} parent=1 // pred_check_branch
      %26 = sbr.rel (0) target = $region13
    $region12: #{tpu_custom_call.1} parent=1 // pred_region
      _
    $region13: #{tpu_custom_call.1} parent=1 // pred_fallthru
      _
    // Predicated region
    $region14: #{tpu_custom_call.1} parent=1 // pred_check
      _
    $region15: #{tpu_custom_call.1} parent=1 // pred_check_branch
      %28 = sbr.rel (0) target = $region17
    $region16: #{tpu_custom_call.1} parent=1 // pred_region
      _
    $region17: #{tpu_custom_call.1} parent=1 // pred_fallthru
      _
    // Predicated region
    $region18: #{tpu_custom_call.1} parent=1 // pred_check
      _
    $region19: #{tpu_custom_call.1} parent=1 // pred_check_branch
      %30 = sbr.rel (0) target = $region21
    $region20: #{tpu_custom_call.1} parent=1 // pred_region
      _
    $region21: #{tpu_custom_call.1} parent=1 // pred_fallthru
      _
    // Predicated region
    $region22: #{tpu_custom_call.1} parent=1 // pred_check
      _
    $region23: #{tpu_custom_call.1} parent=1 // pred_check_branch
      %32 = sbr.rel (0) target = $region25
    $region24: #{tpu_custom_call.1} parent=1 // pred_region
      _
    $region25: #{tpu_custom_call.1} parent=1 // pred_fallthru
      _
    // Predicated region
    $region26: #{tpu_custom_call.1} parent=1 // pred_check
      _
    $region27: #{tpu_custom_call.1} parent=1 // pred_check_branch
      %34 = sbr.rel (0) target = $region29
    $region28: #{tpu_custom_call.1} parent=1 // pred_region
      %36 = vsyncadd [#allocation4], 0
      %s37 = sshll.u32 %s6, 4
      %s38 = int_to_ptr.hbm [resolvable:$true] %s37
      %s39 = sshll.u32 [#allocation3], 4
      %s40 = int_to_ptr.vmem [resolvable:$true] %s39
      %45 = dma.hbm_to_vmem [thread:$0]  %s38, 2048, %s40, [#allocation4], 256, 256, 16
    $region29: #{tpu_custom_call.1} parent=1 // pred_fallthru
      _
    // Predicated region
    $region30: #{tpu_custom_call.1} parent=1 // pred_check
      _
    $region31: #{tpu_custom_call.1} parent=1 // pred_check_branch
      %47 = sbr.rel (0) target = $region33
    $region32: #{tpu_custom_call.1} parent=1 // pred_region
      _
    $region33: #{tpu_custom_call.1} parent=1 // pred_fallthru
      _
    // Predicated region
    $region34: #{tpu_custom_call.1} parent=1 // pred_check
      _
    $region35: #{tpu_custom_call.1} parent=1 // pred_check_branch
      %49 = sbr.rel (0) target = $region37
    $region36: #{tpu_custom_call.1} parent=1 // pred_region
      _
    $region37: #{tpu_custom_call.1} parent=1 // pred_fallthru
      _
    // Predicated region
    $region38: #{tpu_custom_call.1} parent=1 // pred_check
      _
    $region39: #{tpu_custom_call.1} parent=1 // pred_check_branch
      %51 = sbr.rel (0) target = $region41
    $region40: #{tpu_custom_call.1} parent=1 // pred_region
      _
    $region41: #{tpu_custom_call.1} parent=1 // pred_fallthru
      _
    // Predicated region
    $region42: #{tpu_custom_call.1} parent=1 // pred_check
      _
    $region43: #{tpu_custom_call.1} parent=1 // pred_check_branch
      %53 = sbr.rel (0) target = $region45
    $region44: #{tpu_custom_call.1} parent=1 // pred_region
      %55 = dma.done [#allocation4], 2048
    $region45: #{tpu_custom_call.1} parent=1 // pred_fallthru
      _
    %v56 = vld [vmem:[%s0] sm:$0xff]
    %v57 = vld [vmem:[%s0 + $0x8] sm:$0xff]
    %v58 = vld [vmem:[%s0 + $0x10] sm:$0xff]
    %v59 = vld [vmem:[%s0 + $0x18] sm:$0xff]
    %v60 = vld [vmem:[%s0 + $0x20] sm:$0xff]
    %v61 = vld [vmem:[%s0 + $0x28] sm:$0xff]
    %v62 = vld [vmem:[%s0 + $0x30] sm:$0xff]
    %v63 = vld [vmem:[%s0 + $0x38] sm:$0xff]
    %v64 = vld [vmem:[%s2] sm:$0xff]
    %v65 = vld [vmem:[%s2 + $0x8] sm:$0xff]
    %v66 = vld [vmem:[%s2 + $0x10] sm:$0xff]
    %v67 = vld [vmem:[%s2 + $0x18] sm:$0xff]
    %v68 = vld [vmem:[%s4] sm:$0x1]
    %v70 = vperm.slane %v68, 0
    %vm72 = vcmask 261120
    %v74 = vsel %vm72, %v56, 0
    %v77 = vsel %vm72, %v57, 0
    %v80 = vsel %vm72, %v58, 0
    %v83 = vsel %vm72, %v59, 0
    %v86 = vsel %vm72, %v60, 0
    %v89 = vsel %vm72, %v61, 0
    %v92 = vsel %vm72, %v62, 0
    %v95 = vsel %vm72, %v63, 0
    %97 = vmatpush.msra.mxu0 0.0
    %98 = vmatpush.msra.mxu0 0.0
    %99 = vmatpush.msra.mxu0 0.0
    %100 = vmatpush.msra.mxu0 0.0
    %101 = vmatpush.msra.mxu0 0.0
    %102 = vmatpush.msra.mxu0 0.0
    %103 = vmatpush.msra.mxu0 0.0
    %104 = vmatpush.msra.mxu0 0.0
    %105 = vmatpush.msra.mxu0 0.0
    %106 = vmatpush.msra.mxu0 0.0
    %107 = vmatpush.msra.mxu0 0.0
    %108 = vmatpush.msra.mxu0 0.0
    %109 = vmatpush.msra.mxu0 %v67
    %110 = vmatpush.msra.mxu0 %v66
    %111 = vmatpush.msra.mxu0 %v65
    %112 = vmatpush.msra.mxu0 %v64
    %113 = vmatmul.f32.gmra.mxu0 %v74
    %v114 = vpop.f32.mrf.mxu0
    %v115 = vadd.f32 %v70, %v114
    %116 = vmatmul.f32.gmra.mxu0 %v77
    %v117 = vpop.f32.mrf.mxu0
    %v118 = vadd.f32 %v70, %v117
    %119 = vmatmul.f32.gmra.mxu0 %v80
    %v120 = vpop.f32.mrf.mxu0
    %v121 = vadd.f32 %v70, %v120
    %122 = vmatmul.f32.gmra.mxu0 %v83
    %v123 = vpop.f32.mrf.mxu0
    %v124 = vadd.f32 %v70, %v123
    %125 = vmatmul.f32.gmra.mxu0 %v86
    %v126 = vpop.f32.mrf.mxu0
    %v127 = vadd.f32 %v70, %v126
    %128 = vmatmul.f32.gmra.mxu0 %v89
    %v129 = vpop.f32.mrf.mxu0
    %v130 = vadd.f32 %v70, %v129
    %131 = vmatmul.f32.gmra.mxu0 %v92
    %v132 = vpop.f32.mrf.mxu0
    %v133 = vadd.f32 %v70, %v132
    %134 = vmatmul.f32.gmra.mxu0 %v95
    %v135 = vpop.f32.mrf.mxu0
    %v136 = vadd.f32 %v70, %v135
    %137 = vdwg.mxu0
    %v138 = vld [vmem:[%s3] sm:$0xff]
    %v139 = vld [vmem:[%s3 + $0x8] sm:$0xff]
    %v140 = vld [vmem:[%s3 + $0x10] sm:$0xff]
    %v141 = vld [vmem:[%s3 + $0x18] sm:$0xff]
    %v142 = vld [vmem:[%s5] sm:$0x1]
    %v143 = vld [vmem:[#allocation3] sm:$0xff]
    %v144 = vld [vmem:[#allocation3 + $0x8] sm:$0xff]
    %v145 = vld [vmem:[#allocation3 + $0x10] sm:$0xff]
    %v146 = vld [vmem:[#allocation3 + $0x18] sm:$0xff]
    %v147 = vld [vmem:[#allocation3 + $0x20] sm:$0xff]
    %v148 = vld [vmem:[#allocation3 + $0x28] sm:$0xff]
    %v149 = vld [vmem:[#allocation3 + $0x30] sm:$0xff]
    %v150 = vld [vmem:[#allocation3 + $0x38] sm:$0xff]
    %v151 = vld [vmem:[#allocation3 + $0x40] sm:$0xff]
    %v152 = vld [vmem:[#allocation3 + $0x48] sm:$0xff]
    %v153 = vld [vmem:[#allocation3 + $0x50] sm:$0xff]
    %v154 = vld [vmem:[#allocation3 + $0x58] sm:$0xff]
    %v155 = vld [vmem:[#allocation3 + $0x60] sm:$0xff]
    %v156 = vld [vmem:[#allocation3 + $0x68] sm:$0xff]
    %v157 = vld [vmem:[#allocation3 + $0x70] sm:$0xff]
    %v158 = vld [vmem:[#allocation3 + $0x78] sm:$0xff]
    %v159 = vld [vmem:[%s7] sm:$0x3]
    %v160 = vld [vmem:[%s1] sm:$0xff]
    %s161 = scalar_lea.vmem %s1, 8
    %v162 = vld [vmem:[%s161] sm:$0xff]
    %v164 = vperm.slane %v142, 0
    %v167 = vsel %vm72, %v160, 0
    %169 = vmatpush.msra.mxu0 0.0
    %170 = vmatpush.msra.mxu0 0.0
    %171 = vmatpush.msra.mxu0 0.0
    %172 = vmatpush.msra.mxu0 0.0
    %173 = vmatpush.msra.mxu0 0.0
    %174 = vmatpush.msra.mxu0 0.0
    %175 = vmatpush.msra.mxu0 0.0
    %176 = vmatpush.msra.mxu0 0.0
    %177 = vmatpush.msra.mxu0 0.0
    %178 = vmatpush.msra.mxu0 0.0
    %179 = vmatpush.msra.mxu0 0.0
    %180 = vmatpush.msra.mxu0 0.0
    %181 = vmatpush.msra.mxu0 %v141
    %182 = vmatpush.msra.mxu0 %v140
    %183 = vmatpush.msra.mxu0 %v139
    %184 = vmatpush.msra.mxu0 %v138
    %185 = vmatmul.f32.gmra.mxu0 %v167
    %v186 = vpop.f32.mrf.mxu0
    %v187 = vadd.f32 %v164, %v186
    %188 = vdwg.mxu0
    %v189 = vadd.f32 %v115, %v187
    %v190 = vxor.u32 %v189, 2147483648
    %v191 = vmul.f32 %v190, 1.442695
    %v192 = vpow.pop %v191
    %v193 = vadd.f32 %v192, 1.0
    %v194 = vrcp.pop %v193
    %v195 = vmul.f32 %v193, %v194
    %v196 = vsub.f32 1.0, %v195
    %v197 = vmul.f32 %v194, %v196
    %v198 = vadd.f32 %v194, %v197
    %vm199 = vweird.f32 %v193
    %vm200 = vweird.f32 %v194
    %vm201 = vmor %vm199, %vm200
    %v202 = vsel %vm201, %v194, %v198
    %v203 = vand.u32 2147483647, %v193
    %vm204 = vcmp.eq.f32.partialorder %v203, 8.507059e+37
    %v205 = vand.u32 %v193, 2147483648
    %v206 = vor.u32 1.1754944e-38, %v205
    %v207 = vsel %vm204, %v206, %v202
    %v208 = vmul.f32 1.0, %v207
    %210 = vrot.lane.b32.xlu0 %v187, 64
    %v211 = vpop.permute.xlu0 %210
    %v213 = vmul.f32 %v208, %v211
    %215 = vrot.lane.b32.xlu0 %v213, 64
    %v216 = vpop.permute.xlu0 %215
    %v218 = vadd.f32 %v115, %v216
    %v219 = vtanh.pop %v218
    %v220 = vsub.f32 1.0, %v208
    %222 = vrot.lane.b32.xlu0 %v219, 96
    %v223 = vpop.permute.xlu0 %222
    %v225 = vmul.f32 %v220, %v223
    %226 = vrot.lane.b32.xlu0 %v160, 32
    %v227 = vpop.permute.xlu0 %226
    %v229 = vmul.f32 %v208, %v227
    %v230 = vadd.f32 %v225, %v229
    %232 = vrot.lane.b32.xlu0 %v230, 96
    %v233 = vpop.permute.xlu0 %232
    %236 = vrot.lane.b32.xlu0 %v162, 32
    %v237 = vpop.permute.xlu0 %236
    %v239 = vsel %vm72, %v233, %v237
    %v241 = vperm.slane %v159, 0
    %v242 = vperm.slane %v159, 1
    %vm245 = vcmask 523264
    %v247 = vsel %vm245, %v239, 0
    %249 = vmatpush.msra.mxu0 0.0
    %250 = vmatpush.msra.mxu0 0.0
    %251 = vmatpush.msra.mxu0 0.0
    %252 = vmatpush.msra.mxu0 0.0
    %253 = vmatpush.msra.mxu0 0.0
    %254 = vmatpush.msra.mxu0 0.0
    %255 = vmatpush.msra.mxu0 0.0
    %256 = vmatpush.msra.mxu0 0.0
    %257 = vmatpush.msra.mxu0 %v157
    %258 = vmatpush.msra.mxu0 %v155
    %259 = vmatpush.msra.mxu0 %v153
    %260 = vmatpush.msra.mxu0 %v151
    %261 = vmatpush.msra.mxu0 %v149
    %262 = vmatpush.msra.mxu0 %v147
    %263 = vmatpush.msra.mxu0 %v145
    %264 = vmatpush.msra.mxu0 %v143
    %265 = vmatmul.f32.gmra.mxu0 %v247
    %v266 = vpop.f32.mrf.mxu0
    %v267 = vadd.f32 %v241, %v266
    %268 = vdwg.mxu0
    %269 = vmatpush.msra.mxu0 0.0
    %270 = vmatpush.msra.mxu0 0.0
    %271 = vmatpush.msra.mxu0 0.0
    %272 = vmatpush.msra.mxu0 0.0
    %273 = vmatpush.msra.mxu0 0.0
    %274 = vmatpush.msra.mxu0 0.0
    %275 = vmatpush.msra.mxu0 0.0
    %276 = vmatpush.msra.mxu0 0.0
    %277 = vmatpush.msra.mxu0 %v158
    %278 = vmatpush.msra.mxu0 %v156
    %279 = vmatpush.msra.mxu0 %v154
    %280 = vmatpush.msra.mxu0 %v152
    %281 = vmatpush.msra.mxu0 %v150
    %282 = vmatpush.msra.mxu0 %v148
    %283 = vmatpush.msra.mxu0 %v146
    %284 = vmatpush.msra.mxu0 %v144
    %285 = vmatmul.f32.gmra.mxu0 %v247
    %v286 = vpop.f32.mrf.mxu0
    %v287 = vadd.f32 %v242, %v286
    %288 = vdwg.mxu0
    %290 = vrot.lane.b32.xlu0 %v267, 32
    %v291 = vpop.permute.xlu0 %290
    %v293 = vadd.f32 %v267, %v291
    %v294 = vxor.u32 %v293, 2147483648
    %v295 = vmul.f32 %v294, 1.442695
    %v296 = vpow.pop %v295
    %v297 = vadd.f32 %v296, 1.0
    %v298 = vrcp.pop %v297
    %v299 = vmul.f32 %v297, %v298
    %v300 = vsub.f32 1.0, %v299
    %v301 = vmul.f32 %v298, %v300
    %v302 = vadd.f32 %v298, %v301
    %vm303 = vweird.f32 %v297
    %vm304 = vweird.f32 %v298
    %vm305 = vmor %vm303, %vm304
    %v306 = vsel %vm305, %v298, %v302
    %v307 = vand.u32 2147483647, %v297
    %vm308 = vcmp.eq.f32.partialorder %v307, 8.507059e+37
    %v309 = vand.u32 %v297, 2147483648
    %v310 = vor.u32 1.1754944e-38, %v309
    %v311 = vsel %vm308, %v310, %v306
    %v312 = vmul.f32 1.0, %v311
    %314 = vrot.lane.b32.xlu0 %v287, 32
    %v315 = vpop.permute.xlu0 %314
    %v317 = vadd.f32 %v267, %v315
    %v318 = vxor.u32 %v317, 2147483648
    %v319 = vmul.f32 %v318, 1.442695
    %v320 = vpow.pop %v319
    %v321 = vadd.f32 %v320, 1.0
    %v322 = vrcp.pop %v321
    %v323 = vmul.f32 %v321, %v322
    %v324 = vsub.f32 1.0, %v323
    %v325 = vmul.f32 %v322, %v324
    %v326 = vadd.f32 %v322, %v325
    %vm327 = vweird.f32 %v321
    %vm328 = vweird.f32 %v322
    %vm329 = vmor %vm327, %vm328
    %v330 = vsel %vm329, %v322, %v326
    %v331 = vand.u32 2147483647, %v321
    %vm332 = vcmp.eq.f32.partialorder %v331, 8.507059e+37
    %v333 = vand.u32 %v321, 2147483648
    %v334 = vor.u32 1.1754944e-38, %v333
    %v335 = vsel %vm332, %v334, %v330
    %v336 = vmul.f32 1.0, %v335
    %337 = vrot.lane.b32.xlu0 %v287, 96
    %v338 = vpop.permute.xlu0 %337
    %v340 = vmul.f32 %v312, %v338
    %342 = vrot.lane.b32.xlu0 %v340, 64
    %v343 = vpop.permute.xlu0 %342
    %v345 = vadd.f32 %v267, %v343
    %v346 = vtanh.pop %v345
    %v347 = vsub.f32 1.0, %v336
    %349 = vrot.lane.b32.xlu0 %v346, 96
    %v350 = vpop.permute.xlu0 %349
    %v352 = vmul.f32 %v347, %v350
    %v353 = vmul.f32 %v336, %v237
    %v354 = vadd.f32 %v352, %v353
    %v355 = vsel %vm72, %v233, 0
    %357 = vmatpush.msra.mxu0 0.0
    %358 = vmatpush.msra.mxu0 0.0
    %359 = vmatpush.msra.mxu0 0.0
    %360 = vmatpush.msra.mxu0 0.0
    %361 = vmatpush.msra.mxu0 0.0
    %362 = vmatpush.msra.mxu0 0.0
    %363 = vmatpush.msra.mxu0 0.0
    %364 = vmatpush.msra.mxu0 0.0
    %365 = vmatpush.msra.mxu0 0.0
    %366 = vmatpush.msra.mxu0 0.0
    %367 = vmatpush.msra.mxu0 0.0
    %368 = vmatpush.msra.mxu0 0.0
    %369 = vmatpush.msra.mxu0 %v141
    %370 = vmatpush.msra.mxu0 %v140
    %371 = vmatpush.msra.mxu0 %v139
    %372 = vmatpush.msra.mxu0 %v138
    %373 = vmatmul.f32.gmra.mxu0 %v355
    %v374 = vpop.f32.mrf.mxu0
    %v375 = vadd.f32 %v164, %v374
    %376 = vdwg.mxu0
    %v377 = vadd.f32 %v118, %v375
    %v378 = vxor.u32 %v377, 2147483648
    %v379 = vmul.f32 %v378, 1.442695
    %v380 = vpow.pop %v379
    %v381 = vadd.f32 %v380, 1.0
    %v382 = vrcp.pop %v381
    %v383 = vmul.f32 %v381, %v382
    %v384 = vsub.f32 1.0, %v383
    %v385 = vmul.f32 %v382, %v384
    %v386 = vadd.f32 %v382, %v385
    %vm387 = vweird.f32 %v381
    %vm388 = vweird.f32 %v382
    %vm389 = vmor %vm387, %vm388
    %v390 = vsel %vm389, %v382, %v386
    %v391 = vand.u32 2147483647, %v381
    %vm392 = vcmp.eq.f32.partialorder %v391, 8.507059e+37
    %v393 = vand.u32 %v381, 2147483648
    %v394 = vor.u32 1.1754944e-38, %v393
    %v395 = vsel %vm392, %v394, %v390
    %v396 = vmul.f32 1.0, %v395
    %398 = vrot.lane.b32.xlu0 %v375, 64
    %v399 = vpop.permute.xlu0 %398
    %v401 = vmul.f32 %v396, %v399
    %403 = vrot.lane.b32.xlu0 %v401, 64
    %v404 = vpop.permute.xlu0 %403
    %v406 = vadd.f32 %v118, %v404
    %v407 = vtanh.pop %v406
    %v408 = vsub.f32 1.0, %v396
    %410 = vrot.lane.b32.xlu0 %v407, 96
    %v411 = vpop.permute.xlu0 %410
    %v413 = vmul.f32 %v408, %v411
    %v414 = vmul.f32 %v396, %v230
    %v415 = vadd.f32 %v413, %v414
    %417 = vrot.lane.b32.xlu0 %v415, 96
    %v418 = vpop.permute.xlu0 %417
    %v420 = vsel %vm72, %v418, %v354
    %v422 = vsel %vm245, %v420, 0
    %424 = vmatpush.msra.mxu0 0.0
    %425 = vmatpush.msra.mxu0 0.0
    %426 = vmatpush.msra.mxu0 0.0
    %427 = vmatpush.msra.mxu0 0.0
    %428 = vmatpush.msra.mxu0 0.0
    %429 = vmatpush.msra.mxu0 0.0
    %430 = vmatpush.msra.mxu0 0.0
    %431 = vmatpush.msra.mxu0 0.0
    %432 = vmatpush.msra.mxu0 %v157
    %433 = vmatpush.msra.mxu0 %v155
    %434 = vmatpush.msra.mxu0 %v153
    %435 = vmatpush.msra.mxu0 %v151
    %436 = vmatpush.msra.mxu0 %v149
    %437 = vmatpush.msra.mxu0 %v147
    %438 = vmatpush.msra.mxu0 %v145
    %439 = vmatpush.msra.mxu0 %v143
    %440 = vmatmul.f32.gmra.mxu0 %v422
    %v441 = vpop.f32.mrf.mxu0
    %v442 = vadd.f32 %v241, %v441
    %443 = vdwg.mxu0
    %444 = vmatpush.msra.mxu0 0.0
    %445 = vmatpush.msra.mxu0 0.0
    %446 = vmatpush.msra.mxu0 0.0
    %447 = vmatpush.msra.mxu0 0.0
    %448 = vmatpush.msra.mxu0 0.0
    %449 = vmatpush.msra.mxu0 0.0
    %450 = vmatpush.msra.mxu0 0.0
    %451 = vmatpush.msra.mxu0 0.0
    %452 = vmatpush.msra.mxu0 %v158
    %453 = vmatpush.msra.mxu0 %v156
    %454 = vmatpush.msra.mxu0 %v154
    %455 = vmatpush.msra.mxu0 %v152
    %456 = vmatpush.msra.mxu0 %v150
    %457 = vmatpush.msra.mxu0 %v148
    %458 = vmatpush.msra.mxu0 %v146
    %459 = vmatpush.msra.mxu0 %v144
    %460 = vmatmul.f32.gmra.mxu0 %v422
    %v461 = vpop.f32.mrf.mxu0
    %v462 = vadd.f32 %v242, %v461
    %463 = vdwg.mxu0
    %465 = vrot.lane.b32.xlu0 %v442, 32
    %v466 = vpop.permute.xlu0 %465
    %v468 = vadd.f32 %v442, %v466
    %v469 = vxor.u32 %v468, 2147483648
    %v470 = vmul.f32 %v469, 1.442695
    %v471 = vpow.pop %v470
    %v472 = vadd.f32 %v471, 1.0
    %v473 = vrcp.pop %v472
    %v474 = vmul.f32 %v472, %v473
    %v475 = vsub.f32 1.0, %v474
    %v476 = vmul.f32 %v473, %v475
    %v477 = vadd.f32 %v473, %v476
    %vm478 = vweird.f32 %v472
    %vm479 = vweird.f32 %v473
    %vm480 = vmor %vm478, %vm479
    %v481 = vsel %vm480, %v473, %v477
    %v482 = vand.u32 2147483647, %v472
    %vm483 = vcmp.eq.f32.partialorder %v482, 8.507059e+37
    %v484 = vand.u32 %v472, 2147483648
    %v485 = vor.u32 1.1754944e-38, %v484
    %v486 = vsel %vm483, %v485, %v481
    %v487 = vmul.f32 1.0, %v486
    %489 = vrot.lane.b32.xlu0 %v462, 32
    %v490 = vpop.permute.xlu0 %489
    %v492 = vadd.f32 %v442, %v490
    %v493 = vxor.u32 %v492, 2147483648
    %v494 = vmul.f32 %v493, 1.442695
    %v495 = vpow.pop %v494
    %v496 = vadd.f32 %v495, 1.0
    %v497 = vrcp.pop %v496
    %v498 = vmul.f32 %v496, %v497
    %v499 = vsub.f32 1.0, %v498
    %v500 = vmul.f32 %v497, %v499
    %v501 = vadd.f32 %v497, %v500
    %vm502 = vweird.f32 %v496
    %vm503 = vweird.f32 %v497
    %vm504 = vmor %vm502, %vm503
    %v505 = vsel %vm504, %v497, %v501
    %v506 = vand.u32 2147483647, %v496
    %vm507 = vcmp.eq.f32.partialorder %v506, 8.507059e+37
    %v508 = vand.u32 %v496, 2147483648
    %v509 = vor.u32 1.1754944e-38, %v508
    %v510 = vsel %vm507, %v509, %v505
    %v511 = vmul.f32 1.0, %v510
    %512 = vrot.lane.b32.xlu0 %v462, 96
    %v513 = vpop.permute.xlu0 %512
    %v515 = vmul.f32 %v487, %v513
    %517 = vrot.lane.b32.xlu0 %v515, 64
    %v518 = vpop.permute.xlu0 %517
    %v520 = vadd.f32 %v442, %v518
    %v521 = vtanh.pop %v520
    %v522 = vsub.f32 1.0, %v511
    %524 = vrot.lane.b32.xlu0 %v521, 96
    %v525 = vpop.permute.xlu0 %524
    %v527 = vmul.f32 %v522, %v525
    %v528 = vmul.f32 %v511, %v354
    %v529 = vadd.f32 %v527, %v528
    %v530 = vsel %vm72, %v418, 0
    %532 = vmatpush.msra.mxu0 0.0
    %533 = vmatpush.msra.mxu0 0.0
    %534 = vmatpush.msra.mxu0 0.0
    %535 = vmatpush.msra.mxu0 0.0
    %536 = vmatpush.msra.mxu0 0.0
    %537 = vmatpush.msra.mxu0 0.0
    %538 = vmatpush.msra.mxu0 0.0
    %539 = vmatpush.msra.mxu0 0.0
    %540 = vmatpush.msra.mxu0 0.0
    %541 = vmatpush.msra.mxu0 0.0
    %542 = vmatpush.msra.mxu0 0.0
    %543 = vmatpush.msra.mxu0 0.0
    %544 = vmatpush.msra.mxu0 %v141
    %545 = vmatpush.msra.mxu0 %v140
    %546 = vmatpush.msra.mxu0 %v139
    %547 = vmatpush.msra.mxu0 %v138
    %548 = vmatmul.f32.gmra.mxu0 %v530
    %v549 = vpop.f32.mrf.mxu0
    %v550 = vadd.f32 %v164, %v549
    %551 = vdwg.mxu0
    %v552 = vadd.f32 %v121, %v550
    %v553 = vxor.u32 %v552, 2147483648
    %v554 = vmul.f32 %v553, 1.442695
    %v555 = vpow.pop %v554
    %v556 = vadd.f32 %v555, 1.0
    %v557 = vrcp.pop %v556
    %v558 = vmul.f32 %v556, %v557
    %v559 = vsub.f32 1.0, %v558
    %v560 = vmul.f32 %v557, %v559
    %v561 = vadd.f32 %v557, %v560
    %vm562 = vweird.f32 %v556
    %vm563 = vweird.f32 %v557
    %vm564 = vmor %vm562, %vm563
    %v565 = vsel %vm564, %v557, %v561
    %v566 = vand.u32 2147483647, %v556
    %vm567 = vcmp.eq.f32.partialorder %v566, 8.507059e+37
    %v568 = vand.u32 %v556, 2147483648
    %v569 = vor.u32 1.1754944e-38, %v568
    %v570 = vsel %vm567, %v569, %v565
    %v571 = vmul.f32 1.0, %v570
    %573 = vrot.lane.b32.xlu0 %v550, 64
    %v574 = vpop.permute.xlu0 %573
    %v576 = vmul.f32 %v571, %v574
    %578 = vrot.lane.b32.xlu0 %v576, 64
    %v579 = vpop.permute.xlu0 %578
    %v581 = vadd.f32 %v121, %v579
    %v582 = vtanh.pop %v581
    %v583 = vsub.f32 1.0, %v571
    %585 = vrot.lane.b32.xlu0 %v582, 96
    %v586 = vpop.permute.xlu0 %585
    %v588 = vmul.f32 %v583, %v586
    %v589 = vmul.f32 %v571, %v415
    %v590 = vadd.f32 %v588, %v589
    %592 = vrot.lane.b32.xlu0 %v590, 96
    %v593 = vpop.permute.xlu0 %592
    %v595 = vsel %vm72, %v593, %v529
    %v597 = vsel %vm245, %v595, 0
    %599 = vmatpush.msra.mxu0 0.0
    %600 = vmatpush.msra.mxu0 0.0
    %601 = vmatpush.msra.mxu0 0.0
    %602 = vmatpush.msra.mxu0 0.0
    %603 = vmatpush.msra.mxu0 0.0
    %604 = vmatpush.msra.mxu0 0.0
    %605 = vmatpush.msra.mxu0 0.0
    %606 = vmatpush.msra.mxu0 0.0
    %607 = vmatpush.msra.mxu0 %v157
    %608 = vmatpush.msra.mxu0 %v155
    %609 = vmatpush.msra.mxu0 %v153
    %610 = vmatpush.msra.mxu0 %v151
    %611 = vmatpush.msra.mxu0 %v149
    %612 = vmatpush.msra.mxu0 %v147
    %613 = vmatpush.msra.mxu0 %v145
    %614 = vmatpush.msra.mxu0 %v143
    %615 = vmatmul.f32.gmra.mxu0 %v597
    %v616 = vpop.f32.mrf.mxu0
    %v617 = vadd.f32 %v241, %v616
    %618 = vdwg.mxu0
    %619 = vmatpush.msra.mxu0 0.0
    %620 = vmatpush.msra.mxu0 0.0
    %621 = vmatpush.msra.mxu0 0.0
    %622 = vmatpush.msra.mxu0 0.0
    %623 = vmatpush.msra.mxu0 0.0
    %624 = vmatpush.msra.mxu0 0.0
    %625 = vmatpush.msra.mxu0 0.0
    %626 = vmatpush.msra.mxu0 0.0
    %627 = vmatpush.msra.mxu0 %v158
    %628 = vmatpush.msra.mxu0 %v156
    %629 = vmatpush.msra.mxu0 %v154
    %630 = vmatpush.msra.mxu0 %v152
    %631 = vmatpush.msra.mxu0 %v150
    %632 = vmatpush.msra.mxu0 %v148
    %633 = vmatpush.msra.mxu0 %v146
    %634 = vmatpush.msra.mxu0 %v144
    %635 = vmatmul.f32.gmra.mxu0 %v597
    %v636 = vpop.f32.mrf.mxu0
    %v637 = vadd.f32 %v242, %v636
    %638 = vdwg.mxu0
    %640 = vrot.lane.b32.xlu0 %v617, 32
    %v641 = vpop.permute.xlu0 %640
    %v643 = vadd.f32 %v617, %v641
    %v644 = vxor.u32 %v643, 2147483648
    %v645 = vmul.f32 %v644, 1.442695
    %v646 = vpow.pop %v645
    %v647 = vadd.f32 %v646, 1.0
    %v648 = vrcp.pop %v647
    %v649 = vmul.f32 %v647, %v648
    %v650 = vsub.f32 1.0, %v649
    %v651 = vmul.f32 %v648, %v650
    %v652 = vadd.f32 %v648, %v651
    %vm653 = vweird.f32 %v647
    %vm654 = vweird.f32 %v648
    %vm655 = vmor %vm653, %vm654
    %v656 = vsel %vm655, %v648, %v652
    %v657 = vand.u32 2147483647, %v647
    %vm658 = vcmp.eq.f32.partialorder %v657, 8.507059e+37
    %v659 = vand.u32 %v647, 2147483648
    %v660 = vor.u32 1.1754944e-38, %v659
    %v661 = vsel %vm658, %v660, %v656
    %v662 = vmul.f32 1.0, %v661
    %664 = vrot.lane.b32.xlu0 %v637, 32
    %v665 = vpop.permute.xlu0 %664
    %v667 = vadd.f32 %v617, %v665
    %v668 = vxor.u32 %v667, 2147483648
    %v669 = vmul.f32 %v668, 1.442695
    %v670 = vpow.pop %v669
    %v671 = vadd.f32 %v670, 1.0
    %v672 = vrcp.pop %v671
    %v673 = vmul.f32 %v671, %v672
    %v674 = vsub.f32 1.0, %v673
    %v675 = vmul.f32 %v672, %v674
    %v676 = vadd.f32 %v672, %v675
    %vm677 = vweird.f32 %v671
    %vm678 = vweird.f32 %v672
    %vm679 = vmor %vm677, %vm678
    %v680 = vsel %vm679, %v672, %v676
    %v681 = vand.u32 2147483647, %v671
    %vm682 = vcmp.eq.f32.partialorder %v681, 8.507059e+37
    %v683 = vand.u32 %v671, 2147483648
    %v684 = vor.u32 1.1754944e-38, %v683
    %v685 = vsel %vm682, %v684, %v680
    %v686 = vmul.f32 1.0, %v685
    %687 = vrot.lane.b32.xlu0 %v637, 96
    %v688 = vpop.permute.xlu0 %687
    %v690 = vmul.f32 %v662, %v688
    %692 = vrot.lane.b32.xlu0 %v690, 64
    %v693 = vpop.permute.xlu0 %692
    %v695 = vadd.f32 %v617, %v693
    %v696 = vtanh.pop %v695
    %v697 = vsub.f32 1.0, %v686
    %699 = vrot.lane.b32.xlu0 %v696, 96
    %v700 = vpop.permute.xlu0 %699
    %v702 = vmul.f32 %v697, %v700
    %v703 = vmul.f32 %v686, %v529
    %v704 = vadd.f32 %v702, %v703
    %v705 = vsel %vm72, %v593, 0
    %707 = vmatpush.msra.mxu0 0.0
    %708 = vmatpush.msra.mxu0 0.0
    %709 = vmatpush.msra.mxu0 0.0
    %710 = vmatpush.msra.mxu0 0.0
    %711 = vmatpush.msra.mxu0 0.0
    %712 = vmatpush.msra.mxu0 0.0
    %713 = vmatpush.msra.mxu0 0.0
    %714 = vmatpush.msra.mxu0 0.0
    %715 = vmatpush.msra.mxu0 0.0
    %716 = vmatpush.msra.mxu0 0.0
    %717 = vmatpush.msra.mxu0 0.0
    %718 = vmatpush.msra.mxu0 0.0
    %719 = vmatpush.msra.mxu0 %v141
    %720 = vmatpush.msra.mxu0 %v140
    %721 = vmatpush.msra.mxu0 %v139
    %722 = vmatpush.msra.mxu0 %v138
    %723 = vmatmul.f32.gmra.mxu0 %v705
    %v724 = vpop.f32.mrf.mxu0
    %v725 = vadd.f32 %v164, %v724
    %726 = vdwg.mxu0
    %v727 = vadd.f32 %v124, %v725
    %v728 = vxor.u32 %v727, 2147483648
    %v729 = vmul.f32 %v728, 1.442695
    %v730 = vpow.pop %v729
    %v731 = vadd.f32 %v730, 1.0
    %v732 = vrcp.pop %v731
    %v733 = vmul.f32 %v731, %v732
    %v734 = vsub.f32 1.0, %v733
    %v735 = vmul.f32 %v732, %v734
    %v736 = vadd.f32 %v732, %v735
    %vm737 = vweird.f32 %v731
    %vm738 = vweird.f32 %v732
    %vm739 = vmor %vm737, %vm738
    %v740 = vsel %vm739, %v732, %v736
    %v741 = vand.u32 2147483647, %v731
    %vm742 = vcmp.eq.f32.partialorder %v741, 8.507059e+37
    %v743 = vand.u32 %v731, 2147483648
    %v744 = vor.u32 1.1754944e-38, %v743
    %v745 = vsel %vm742, %v744, %v740
    %v746 = vmul.f32 1.0, %v745
    %748 = vrot.lane.b32.xlu0 %v725, 64
    %v749 = vpop.permute.xlu0 %748
    %v751 = vmul.f32 %v746, %v749
    %753 = vrot.lane.b32.xlu0 %v751, 64
    %v754 = vpop.permute.xlu0 %753
    %v756 = vadd.f32 %v124, %v754
    %v757 = vtanh.pop %v756
    %v758 = vsub.f32 1.0, %v746
    %760 = vrot.lane.b32.xlu0 %v757, 96
    %v761 = vpop.permute.xlu0 %760
    %v763 = vmul.f32 %v758, %v761
    %v764 = vmul.f32 %v746, %v590
    %v765 = vadd.f32 %v763, %v764
    %767 = vrot.lane.b32.xlu0 %v765, 96
    %v768 = vpop.permute.xlu0 %767
    %v770 = vsel %vm72, %v768, %v704
    %v772 = vsel %vm245, %v770, 0
    %774 = vmatpush.msra.mxu0 0.0
    %775 = vmatpush.msra.mxu0 0.0
    %776 = vmatpush.msra.mxu0 0.0
    %777 = vmatpush.msra.mxu0 0.0
    %778 = vmatpush.msra.mxu0 0.0
    %779 = vmatpush.msra.mxu0 0.0
    %780 = vmatpush.msra.mxu0 0.0
    %781 = vmatpush.msra.mxu0 0.0
    %782 = vmatpush.msra.mxu0 %v157
    %783 = vmatpush.msra.mxu0 %v155
    %784 = vmatpush.msra.mxu0 %v153
    %785 = vmatpush.msra.mxu0 %v151
    %786 = vmatpush.msra.mxu0 %v149
    %787 = vmatpush.msra.mxu0 %v147
    %788 = vmatpush.msra.mxu0 %v145
    %789 = vmatpush.msra.mxu0 %v143
    %790 = vmatmul.f32.gmra.mxu0 %v772
    %v791 = vpop.f32.mrf.mxu0
    %v792 = vadd.f32 %v241, %v791
    %793 = vdwg.mxu0
    %794 = vmatpush.msra.mxu0 0.0
    %795 = vmatpush.msra.mxu0 0.0
    %796 = vmatpush.msra.mxu0 0.0
    %797 = vmatpush.msra.mxu0 0.0
    %798 = vmatpush.msra.mxu0 0.0
    %799 = vmatpush.msra.mxu0 0.0
    %800 = vmatpush.msra.mxu0 0.0
    %801 = vmatpush.msra.mxu0 0.0
    %802 = vmatpush.msra.mxu0 %v158
    %803 = vmatpush.msra.mxu0 %v156
    %804 = vmatpush.msra.mxu0 %v154
    %805 = vmatpush.msra.mxu0 %v152
    %806 = vmatpush.msra.mxu0 %v150
    %807 = vmatpush.msra.mxu0 %v148
    %808 = vmatpush.msra.mxu0 %v146
    %809 = vmatpush.msra.mxu0 %v144
    %810 = vmatmul.f32.gmra.mxu0 %v772
    %v811 = vpop.f32.mrf.mxu0
    %v812 = vadd.f32 %v242, %v811
    %813 = vdwg.mxu0
    %815 = vrot.lane.b32.xlu0 %v792, 32
    %v816 = vpop.permute.xlu0 %815
    %v818 = vadd.f32 %v792, %v816
    %v819 = vxor.u32 %v818, 2147483648
    %v820 = vmul.f32 %v819, 1.442695
    %v821 = vpow.pop %v820
    %v822 = vadd.f32 %v821, 1.0
    %v823 = vrcp.pop %v822
    %v824 = vmul.f32 %v822, %v823
    %v825 = vsub.f32 1.0, %v824
    %v826 = vmul.f32 %v823, %v825
    %v827 = vadd.f32 %v823, %v826
    %vm828 = vweird.f32 %v822
    %vm829 = vweird.f32 %v823
    %vm830 = vmor %vm828, %vm829
    %v831 = vsel %vm830, %v823, %v827
    %v832 = vand.u32 2147483647, %v822
    %vm833 = vcmp.eq.f32.partialorder %v832, 8.507059e+37
    %v834 = vand.u32 %v822, 2147483648
    %v835 = vor.u32 1.1754944e-38, %v834
    %v836 = vsel %vm833, %v835, %v831
    %v837 = vmul.f32 1.0, %v836
    %839 = vrot.lane.b32.xlu0 %v812, 32
    %v840 = vpop.permute.xlu0 %839
    %v842 = vadd.f32 %v792, %v840
    %v843 = vxor.u32 %v842, 2147483648
    %v844 = vmul.f32 %v843, 1.442695
    %v845 = vpow.pop %v844
    %v846 = vadd.f32 %v845, 1.0
    %v847 = vrcp.pop %v846
    %v848 = vmul.f32 %v846, %v847
    %v849 = vsub.f32 1.0, %v848
    %v850 = vmul.f32 %v847, %v849
    %v851 = vadd.f32 %v847, %v850
    %vm852 = vweird.f32 %v846
    %vm853 = vweird.f32 %v847
    %vm854 = vmor %vm852, %vm853
    %v855 = vsel %vm854, %v847, %v851
    %v856 = vand.u32 2147483647, %v846
    %vm857 = vcmp.eq.f32.partialorder %v856, 8.507059e+37
    %v858 = vand.u32 %v846, 2147483648
    %v859 = vor.u32 1.1754944e-38, %v858
    %v860 = vsel %vm857, %v859, %v855
    %v861 = vmul.f32 1.0, %v860
    %862 = vrot.lane.b32.xlu0 %v812, 96
    %v863 = vpop.permute.xlu0 %862
    %v865 = vmul.f32 %v837, %v863
    %867 = vrot.lane.b32.xlu0 %v865, 64
    %v868 = vpop.permute.xlu0 %867
    %v870 = vadd.f32 %v792, %v868
    %v871 = vtanh.pop %v870
    %v872 = vsub.f32 1.0, %v861
    %874 = vrot.lane.b32.xlu0 %v871, 96
    %v875 = vpop.permute.xlu0 %874
    %v877 = vmul.f32 %v872, %v875
    %v878 = vmul.f32 %v861, %v704
    %v879 = vadd.f32 %v877, %v878
    %v880 = vsel %vm72, %v768, 0
    %882 = vmatpush.msra.mxu0 0.0
    %883 = vmatpush.msra.mxu0 0.0
    %884 = vmatpush.msra.mxu0 0.0
    %885 = vmatpush.msra.mxu0 0.0
    %886 = vmatpush.msra.mxu0 0.0
    %887 = vmatpush.msra.mxu0 0.0
    %888 = vmatpush.msra.mxu0 0.0
    %889 = vmatpush.msra.mxu0 0.0
    %890 = vmatpush.msra.mxu0 0.0
    %891 = vmatpush.msra.mxu0 0.0
    %892 = vmatpush.msra.mxu0 0.0
    %893 = vmatpush.msra.mxu0 0.0
    %894 = vmatpush.msra.mxu0 %v141
    %895 = vmatpush.msra.mxu0 %v140
    %896 = vmatpush.msra.mxu0 %v139
    %897 = vmatpush.msra.mxu0 %v138
    %898 = vmatmul.f32.gmra.mxu0 %v880
    %v899 = vpop.f32.mrf.mxu0
    %v900 = vadd.f32 %v164, %v899
    %901 = vdwg.mxu0
    %v902 = vadd.f32 %v127, %v900
    %v903 = vxor.u32 %v902, 2147483648
    %v904 = vmul.f32 %v903, 1.442695
    %v905 = vpow.pop %v904
    %v906 = vadd.f32 %v905, 1.0
    %v907 = vrcp.pop %v906
    %v908 = vmul.f32 %v906, %v907
    %v909 = vsub.f32 1.0, %v908
    %v910 = vmul.f32 %v907, %v909
    %v911 = vadd.f32 %v907, %v910
    %vm912 = vweird.f32 %v906
    %vm913 = vweird.f32 %v907
    %vm914 = vmor %vm912, %vm913
    %v915 = vsel %vm914, %v907, %v911
    %v916 = vand.u32 2147483647, %v906
    %vm917 = vcmp.eq.f32.partialorder %v916, 8.507059e+37
    %v918 = vand.u32 %v906, 2147483648
    %v919 = vor.u32 1.1754944e-38, %v918
    %v920 = vsel %vm917, %v919, %v915
    %v921 = vmul.f32 1.0, %v920
    %923 = vrot.lane.b32.xlu0 %v900, 64
    %v924 = vpop.permute.xlu0 %923
    %v926 = vmul.f32 %v921, %v924
    %928 = vrot.lane.b32.xlu0 %v926, 64
    %v929 = vpop.permute.xlu0 %928
    %v931 = vadd.f32 %v127, %v929
    %v932 = vtanh.pop %v931
    %v933 = vsub.f32 1.0, %v921
    %935 = vrot.lane.b32.xlu0 %v932, 96
    %v936 = vpop.permute.xlu0 %935
    %v938 = vmul.f32 %v933, %v936
    %v939 = vmul.f32 %v921, %v765
    %v940 = vadd.f32 %v938, %v939
    %942 = vrot.lane.b32.xlu0 %v940, 96
    %v943 = vpop.permute.xlu0 %942
    %v945 = vsel %vm72, %v943, %v879
    %v947 = vsel %vm245, %v945, 0
    %949 = vmatpush.msra.mxu0 0.0
    %950 = vmatpush.msra.mxu0 0.0
    %951 = vmatpush.msra.mxu0 0.0
    %952 = vmatpush.msra.mxu0 0.0
    %953 = vmatpush.msra.mxu0 0.0
    %954 = vmatpush.msra.mxu0 0.0
    %955 = vmatpush.msra.mxu0 0.0
    %956 = vmatpush.msra.mxu0 0.0
    %957 = vmatpush.msra.mxu0 %v157
    %958 = vmatpush.msra.mxu0 %v155
    %959 = vmatpush.msra.mxu0 %v153
    %960 = vmatpush.msra.mxu0 %v151
    %961 = vmatpush.msra.mxu0 %v149
    %962 = vmatpush.msra.mxu0 %v147
    %963 = vmatpush.msra.mxu0 %v145
    %964 = vmatpush.msra.mxu0 %v143
    %965 = vmatmul.f32.gmra.mxu0 %v947
    %v966 = vpop.f32.mrf.mxu0
    %v967 = vadd.f32 %v241, %v966
    %968 = vdwg.mxu0
    %969 = vmatpush.msra.mxu0 0.0
    %970 = vmatpush.msra.mxu0 0.0
    %971 = vmatpush.msra.mxu0 0.0
    %972 = vmatpush.msra.mxu0 0.0
    %973 = vmatpush.msra.mxu0 0.0
    %974 = vmatpush.msra.mxu0 0.0
    %975 = vmatpush.msra.mxu0 0.0
    %976 = vmatpush.msra.mxu0 0.0
    %977 = vmatpush.msra.mxu0 %v158
    %978 = vmatpush.msra.mxu0 %v156
    %979 = vmatpush.msra.mxu0 %v154
    %980 = vmatpush.msra.mxu0 %v152
    %981 = vmatpush.msra.mxu0 %v150
    %982 = vmatpush.msra.mxu0 %v148
    %983 = vmatpush.msra.mxu0 %v146
    %984 = vmatpush.msra.mxu0 %v144
    %985 = vmatmul.f32.gmra.mxu0 %v947
    %v986 = vpop.f32.mrf.mxu0
    %v987 = vadd.f32 %v242, %v986
    %988 = vdwg.mxu0
    %990 = vrot.lane.b32.xlu0 %v967, 32
    %v991 = vpop.permute.xlu0 %990
    %v993 = vadd.f32 %v967, %v991
    %v994 = vxor.u32 %v993, 2147483648
    %v995 = vmul.f32 %v994, 1.442695
    %v996 = vpow.pop %v995
    %v997 = vadd.f32 %v996, 1.0
    %v998 = vrcp.pop %v997
    %v999 = vmul.f32 %v997, %v998
    %v1000 = vsub.f32 1.0, %v999
    %v1001 = vmul.f32 %v998, %v1000
    %v1002 = vadd.f32 %v998, %v1001
    %vm1003 = vweird.f32 %v997
    %vm1004 = vweird.f32 %v998
    %vm1005 = vmor %vm1003, %vm1004
    %v1006 = vsel %vm1005, %v998, %v1002
    %v1007 = vand.u32 2147483647, %v997
    %vm1008 = vcmp.eq.f32.partialorder %v1007, 8.507059e+37
    %v1009 = vand.u32 %v997, 2147483648
    %v1010 = vor.u32 1.1754944e-38, %v1009
    %v1011 = vsel %vm1008, %v1010, %v1006
    %v1012 = vmul.f32 1.0, %v1011
    %1014 = vrot.lane.b32.xlu0 %v987, 32
    %v1015 = vpop.permute.xlu0 %1014
    %v1017 = vadd.f32 %v967, %v1015
    %v1018 = vxor.u32 %v1017, 2147483648
    %v1019 = vmul.f32 %v1018, 1.442695
    %v1020 = vpow.pop %v1019
    %v1021 = vadd.f32 %v1020, 1.0
    %v1022 = vrcp.pop %v1021
    %v1023 = vmul.f32 %v1021, %v1022
    %v1024 = vsub.f32 1.0, %v1023
    %v1025 = vmul.f32 %v1022, %v1024
    %v1026 = vadd.f32 %v1022, %v1025
    %vm1027 = vweird.f32 %v1021
    %vm1028 = vweird.f32 %v1022
    %vm1029 = vmor %vm1027, %vm1028
    %v1030 = vsel %vm1029, %v1022, %v1026
    %v1031 = vand.u32 2147483647, %v1021
    %vm1032 = vcmp.eq.f32.partialorder %v1031, 8.507059e+37
    %v1033 = vand.u32 %v1021, 2147483648
    %v1034 = vor.u32 1.1754944e-38, %v1033
    %v1035 = vsel %vm1032, %v1034, %v1030
    %v1036 = vmul.f32 1.0, %v1035
    %1037 = vrot.lane.b32.xlu0 %v987, 96
    %v1038 = vpop.permute.xlu0 %1037
    %v1040 = vmul.f32 %v1012, %v1038
    %1042 = vrot.lane.b32.xlu0 %v1040, 64
    %v1043 = vpop.permute.xlu0 %1042
    %v1045 = vadd.f32 %v967, %v1043
    %v1046 = vtanh.pop %v1045
    %v1047 = vsub.f32 1.0, %v1036
    %1049 = vrot.lane.b32.xlu0 %v1046, 96
    %v1050 = vpop.permute.xlu0 %1049
    %v1052 = vmul.f32 %v1047, %v1050
    %v1053 = vmul.f32 %v1036, %v879
    %v1054 = vadd.f32 %v1052, %v1053
    %v1055 = vsel %vm72, %v943, 0
    %1057 = vmatpush.msra.mxu0 0.0
    %1058 = vmatpush.msra.mxu0 0.0
    %1059 = vmatpush.msra.mxu0 0.0
    %1060 = vmatpush.msra.mxu0 0.0
    %1061 = vmatpush.msra.mxu0 0.0
    %1062 = vmatpush.msra.mxu0 0.0
    %1063 = vmatpush.msra.mxu0 0.0
    %1064 = vmatpush.msra.mxu0 0.0
    %1065 = vmatpush.msra.mxu0 0.0
    %1066 = vmatpush.msra.mxu0 0.0
    %1067 = vmatpush.msra.mxu0 0.0
    %1068 = vmatpush.msra.mxu0 0.0
    %1069 = vmatpush.msra.mxu0 %v141
    %1070 = vmatpush.msra.mxu0 %v140
    %1071 = vmatpush.msra.mxu0 %v139
    %1072 = vmatpush.msra.mxu0 %v138
    %1073 = vmatmul.f32.gmra.mxu0 %v1055
    %v1074 = vpop.f32.mrf.mxu0
    %v1075 = vadd.f32 %v164, %v1074
    %1076 = vdwg.mxu0
    %v1077 = vadd.f32 %v130, %v1075
    %v1078 = vxor.u32 %v1077, 2147483648
    %v1079 = vmul.f32 %v1078, 1.442695
    %v1080 = vpow.pop %v1079
    %v1081 = vadd.f32 %v1080, 1.0
    %v1082 = vrcp.pop %v1081
    %v1083 = vmul.f32 %v1081, %v1082
    %v1084 = vsub.f32 1.0, %v1083
    %v1085 = vmul.f32 %v1082, %v1084
    %v1086 = vadd.f32 %v1082, %v1085
    %vm1087 = vweird.f32 %v1081
    %vm1088 = vweird.f32 %v1082
    %vm1089 = vmor %vm1087, %vm1088
    %v1090 = vsel %vm1089, %v1082, %v1086
    %v1091 = vand.u32 2147483647, %v1081
    %vm1092 = vcmp.eq.f32.partialorder %v1091, 8.507059e+37
    %v1093 = vand.u32 %v1081, 2147483648
    %v1094 = vor.u32 1.1754944e-38, %v1093
    %v1095 = vsel %vm1092, %v1094, %v1090
    %v1096 = vmul.f32 1.0, %v1095
    %1098 = vrot.lane.b32.xlu0 %v1075, 64
    %v1099 = vpop.permute.xlu0 %1098
    %v1101 = vmul.f32 %v1096, %v1099
    %1103 = vrot.lane.b32.xlu0 %v1101, 64
    %v1104 = vpop.permute.xlu0 %1103
    %v1106 = vadd.f32 %v130, %v1104
    %v1107 = vtanh.pop %v1106
    %v1108 = vsub.f32 1.0, %v1096
    %1110 = vrot.lane.b32.xlu0 %v1107, 96
    %v1111 = vpop.permute.xlu0 %1110
    %v1113 = vmul.f32 %v1108, %v1111
    %v1114 = vmul.f32 %v1096, %v940
    %v1115 = vadd.f32 %v1113, %v1114
    %1117 = vrot.lane.b32.xlu0 %v1115, 96
    %v1118 = vpop.permute.xlu0 %1117
    %v1120 = vsel %vm72, %v1118, %v1054
    %v1122 = vsel %vm245, %v1120, 0
    %1124 = vmatpush.msra.mxu0 0.0
    %1125 = vmatpush.msra.mxu0 0.0
    %1126 = vmatpush.msra.mxu0 0.0
    %1127 = vmatpush.msra.mxu0 0.0
    %1128 = vmatpush.msra.mxu0 0.0
    %1129 = vmatpush.msra.mxu0 0.0
    %1130 = vmatpush.msra.mxu0 0.0
    %1131 = vmatpush.msra.mxu0 0.0
    %1132 = vmatpush.msra.mxu0 %v157
    %1133 = vmatpush.msra.mxu0 %v155
    %1134 = vmatpush.msra.mxu0 %v153
    %1135 = vmatpush.msra.mxu0 %v151
    %1136 = vmatpush.msra.mxu0 %v149
    %1137 = vmatpush.msra.mxu0 %v147
    %1138 = vmatpush.msra.mxu0 %v145
    %1139 = vmatpush.msra.mxu0 %v143
    %1140 = vmatmul.f32.gmra.mxu0 %v1122
    %v1141 = vpop.f32.mrf.mxu0
    %v1142 = vadd.f32 %v241, %v1141
    %1143 = vdwg.mxu0
    %1144 = vmatpush.msra.mxu0 0.0
    %1145 = vmatpush.msra.mxu0 0.0
    %1146 = vmatpush.msra.mxu0 0.0
    %1147 = vmatpush.msra.mxu0 0.0
    %1148 = vmatpush.msra.mxu0 0.0
    %1149 = vmatpush.msra.mxu0 0.0
    %1150 = vmatpush.msra.mxu0 0.0
    %1151 = vmatpush.msra.mxu0 0.0
    %1152 = vmatpush.msra.mxu0 %v158
    %1153 = vmatpush.msra.mxu0 %v156
    %1154 = vmatpush.msra.mxu0 %v154
    %1155 = vmatpush.msra.mxu0 %v152
    %1156 = vmatpush.msra.mxu0 %v150
    %1157 = vmatpush.msra.mxu0 %v148
    %1158 = vmatpush.msra.mxu0 %v146
    %1159 = vmatpush.msra.mxu0 %v144
    %1160 = vmatmul.f32.gmra.mxu0 %v1122
    %v1161 = vpop.f32.mrf.mxu0
    %v1162 = vadd.f32 %v242, %v1161
    %1163 = vdwg.mxu0
    %1165 = vrot.lane.b32.xlu0 %v1142, 32
    %v1166 = vpop.permute.xlu0 %1165
    %v1168 = vadd.f32 %v1142, %v1166
    %v1169 = vxor.u32 %v1168, 2147483648
    %v1170 = vmul.f32 %v1169, 1.442695
    %v1171 = vpow.pop %v1170
    %v1172 = vadd.f32 %v1171, 1.0
    %v1173 = vrcp.pop %v1172
    %v1174 = vmul.f32 %v1172, %v1173
    %v1175 = vsub.f32 1.0, %v1174
    %v1176 = vmul.f32 %v1173, %v1175
    %v1177 = vadd.f32 %v1173, %v1176
    %vm1178 = vweird.f32 %v1172
    %vm1179 = vweird.f32 %v1173
    %vm1180 = vmor %vm1178, %vm1179
    %v1181 = vsel %vm1180, %v1173, %v1177
    %v1182 = vand.u32 2147483647, %v1172
    %vm1183 = vcmp.eq.f32.partialorder %v1182, 8.507059e+37
    %v1184 = vand.u32 %v1172, 2147483648
    %v1185 = vor.u32 1.1754944e-38, %v1184
    %v1186 = vsel %vm1183, %v1185, %v1181
    %v1187 = vmul.f32 1.0, %v1186
    %1189 = vrot.lane.b32.xlu0 %v1162, 32
    %v1190 = vpop.permute.xlu0 %1189
    %v1192 = vadd.f32 %v1142, %v1190
    %v1193 = vxor.u32 %v1192, 2147483648
    %v1194 = vmul.f32 %v1193, 1.442695
    %v1195 = vpow.pop %v1194
    %v1196 = vadd.f32 %v1195, 1.0
    %v1197 = vrcp.pop %v1196
    %v1198 = vmul.f32 %v1196, %v1197
    %v1199 = vsub.f32 1.0, %v1198
    %v1200 = vmul.f32 %v1197, %v1199
    %v1201 = vadd.f32 %v1197, %v1200
    %vm1202 = vweird.f32 %v1196
    %vm1203 = vweird.f32 %v1197
    %vm1204 = vmor %vm1202, %vm1203
    %v1205 = vsel %vm1204, %v1197, %v1201
    %v1206 = vand.u32 2147483647, %v1196
    %vm1207 = vcmp.eq.f32.partialorder %v1206, 8.507059e+37
    %v1208 = vand.u32 %v1196, 2147483648
    %v1209 = vor.u32 1.1754944e-38, %v1208
    %v1210 = vsel %vm1207, %v1209, %v1205
    %v1211 = vmul.f32 1.0, %v1210
    %1212 = vrot.lane.b32.xlu0 %v1162, 96
    %v1213 = vpop.permute.xlu0 %1212
    %v1215 = vmul.f32 %v1187, %v1213
    %1217 = vrot.lane.b32.xlu0 %v1215, 64
    %v1218 = vpop.permute.xlu0 %1217
    %v1220 = vadd.f32 %v1142, %v1218
    %v1221 = vtanh.pop %v1220
    %v1222 = vsub.f32 1.0, %v1211
    %1224 = vrot.lane.b32.xlu0 %v1221, 96
    %v1225 = vpop.permute.xlu0 %1224
    %v1227 = vmul.f32 %v1222, %v1225
    %v1228 = vmul.f32 %v1211, %v1054
    %v1229 = vadd.f32 %v1227, %v1228
    %v1230 = vsel %vm72, %v1118, 0
    %1232 = vmatpush.msra.mxu0 0.0
    %1233 = vmatpush.msra.mxu0 0.0
    %1234 = vmatpush.msra.mxu0 0.0
    %1235 = vmatpush.msra.mxu0 0.0
    %1236 = vmatpush.msra.mxu0 0.0
    %1237 = vmatpush.msra.mxu0 0.0
    %1238 = vmatpush.msra.mxu0 0.0
    %1239 = vmatpush.msra.mxu0 0.0
    %1240 = vmatpush.msra.mxu0 0.0
    %1241 = vmatpush.msra.mxu0 0.0
    %1242 = vmatpush.msra.mxu0 0.0
    %1243 = vmatpush.msra.mxu0 0.0
    %1244 = vmatpush.msra.mxu0 %v141
    %1245 = vmatpush.msra.mxu0 %v140
    %1246 = vmatpush.msra.mxu0 %v139
    %1247 = vmatpush.msra.mxu0 %v138
    %1248 = vmatmul.f32.gmra.mxu0 %v1230
    %v1249 = vpop.f32.mrf.mxu0
    %v1250 = vadd.f32 %v164, %v1249
    %1251 = vdwg.mxu0
    %v1252 = vadd.f32 %v133, %v1250
    %v1253 = vxor.u32 %v1252, 2147483648
    %v1254 = vmul.f32 %v1253, 1.442695
    %v1255 = vpow.pop %v1254
    %v1256 = vadd.f32 %v1255, 1.0
    %v1257 = vrcp.pop %v1256
    %v1258 = vmul.f32 %v1256, %v1257
    %v1259 = vsub.f32 1.0, %v1258
    %v1260 = vmul.f32 %v1257, %v1259
    %v1261 = vadd.f32 %v1257, %v1260
    %vm1262 = vweird.f32 %v1256
    %vm1263 = vweird.f32 %v1257
    %vm1264 = vmor %vm1262, %vm1263
    %v1265 = vsel %vm1264, %v1257, %v1261
    %v1266 = vand.u32 2147483647, %v1256
    %vm1267 = vcmp.eq.f32.partialorder %v1266, 8.507059e+37
    %v1268 = vand.u32 %v1256, 2147483648
    %v1269 = vor.u32 1.1754944e-38, %v1268
    %v1270 = vsel %vm1267, %v1269, %v1265
    %v1271 = vmul.f32 1.0, %v1270
    %1273 = vrot.lane.b32.xlu0 %v1250, 64
    %v1274 = vpop.permute.xlu0 %1273
    %v1276 = vmul.f32 %v1271, %v1274
    %1278 = vrot.lane.b32.xlu0 %v1276, 64
    %v1279 = vpop.permute.xlu0 %1278
    %v1281 = vadd.f32 %v133, %v1279
    %v1282 = vtanh.pop %v1281
    %v1283 = vsub.f32 1.0, %v1271
    %1285 = vrot.lane.b32.xlu0 %v1282, 96
    %v1286 = vpop.permute.xlu0 %1285
    %v1288 = vmul.f32 %v1283, %v1286
    %v1289 = vmul.f32 %v1271, %v1115
    %v1290 = vadd.f32 %v1288, %v1289
    %1292 = vrot.lane.b32.xlu0 %v1290, 96
    %v1293 = vpop.permute.xlu0 %1292
    %v1295 = vsel %vm72, %v1293, %v1229
    %v1297 = vsel %vm245, %v1295, 0
    %1299 = vmatpush.msra.mxu0 0.0
    %1300 = vmatpush.msra.mxu0 0.0
    %1301 = vmatpush.msra.mxu0 0.0
    %1302 = vmatpush.msra.mxu0 0.0
    %1303 = vmatpush.msra.mxu0 0.0
    %1304 = vmatpush.msra.mxu0 0.0
    %1305 = vmatpush.msra.mxu0 0.0
    %1306 = vmatpush.msra.mxu0 0.0
    %1307 = vmatpush.msra.mxu0 %v157
    %1308 = vmatpush.msra.mxu0 %v155
    %1309 = vmatpush.msra.mxu0 %v153
    %1310 = vmatpush.msra.mxu0 %v151
    %1311 = vmatpush.msra.mxu0 %v149
    %1312 = vmatpush.msra.mxu0 %v147
    %1313 = vmatpush.msra.mxu0 %v145
    %1314 = vmatpush.msra.mxu0 %v143
    %1315 = vmatmul.f32.gmra.mxu0 %v1297
    %v1316 = vpop.f32.mrf.mxu0
    %v1317 = vadd.f32 %v241, %v1316
    %1318 = vdwg.mxu0
    %1319 = vmatpush.msra.mxu0 0.0
    %1320 = vmatpush.msra.mxu0 0.0
    %1321 = vmatpush.msra.mxu0 0.0
    %1322 = vmatpush.msra.mxu0 0.0
    %1323 = vmatpush.msra.mxu0 0.0
    %1324 = vmatpush.msra.mxu0 0.0
    %1325 = vmatpush.msra.mxu0 0.0
    %1326 = vmatpush.msra.mxu0 0.0
    %1327 = vmatpush.msra.mxu0 %v158
    %1328 = vmatpush.msra.mxu0 %v156
    %1329 = vmatpush.msra.mxu0 %v154
    %1330 = vmatpush.msra.mxu0 %v152
    %1331 = vmatpush.msra.mxu0 %v150
    %1332 = vmatpush.msra.mxu0 %v148
    %1333 = vmatpush.msra.mxu0 %v146
    %1334 = vmatpush.msra.mxu0 %v144
    %1335 = vmatmul.f32.gmra.mxu0 %v1297
    %v1336 = vpop.f32.mrf.mxu0
    %v1337 = vadd.f32 %v242, %v1336
    %1338 = vdwg.mxu0
    %1340 = vrot.lane.b32.xlu0 %v1317, 32
    %v1341 = vpop.permute.xlu0 %1340
    %v1343 = vadd.f32 %v1317, %v1341
    %v1344 = vxor.u32 %v1343, 2147483648
    %v1345 = vmul.f32 %v1344, 1.442695
    %v1346 = vpow.pop %v1345
    %v1347 = vadd.f32 %v1346, 1.0
    %v1348 = vrcp.pop %v1347
    %v1349 = vmul.f32 %v1347, %v1348
    %v1350 = vsub.f32 1.0, %v1349
    %v1351 = vmul.f32 %v1348, %v1350
    %v1352 = vadd.f32 %v1348, %v1351
    %vm1353 = vweird.f32 %v1347
    %vm1354 = vweird.f32 %v1348
    %vm1355 = vmor %vm1353, %vm1354
    %v1356 = vsel %vm1355, %v1348, %v1352
    %v1357 = vand.u32 2147483647, %v1347
    %vm1358 = vcmp.eq.f32.partialorder %v1357, 8.507059e+37
    %v1359 = vand.u32 %v1347, 2147483648
    %v1360 = vor.u32 1.1754944e-38, %v1359
    %v1361 = vsel %vm1358, %v1360, %v1356
    %v1362 = vmul.f32 1.0, %v1361
    %1364 = vrot.lane.b32.xlu0 %v1337, 32
    %v1365 = vpop.permute.xlu0 %1364
    %v1367 = vadd.f32 %v1317, %v1365
    %v1368 = vxor.u32 %v1367, 2147483648
    %v1369 = vmul.f32 %v1368, 1.442695
    %v1370 = vpow.pop %v1369
    %v1371 = vadd.f32 %v1370, 1.0
    %v1372 = vrcp.pop %v1371
    %v1373 = vmul.f32 %v1371, %v1372
    %v1374 = vsub.f32 1.0, %v1373
    %v1375 = vmul.f32 %v1372, %v1374
    %v1376 = vadd.f32 %v1372, %v1375
    %vm1377 = vweird.f32 %v1371
    %vm1378 = vweird.f32 %v1372
    %vm1379 = vmor %vm1377, %vm1378
    %v1380 = vsel %vm1379, %v1372, %v1376
    %v1381 = vand.u32 2147483647, %v1371
    %vm1382 = vcmp.eq.f32.partialorder %v1381, 8.507059e+37
    %v1383 = vand.u32 %v1371, 2147483648
    %v1384 = vor.u32 1.1754944e-38, %v1383
    %v1385 = vsel %vm1382, %v1384, %v1380
    %v1386 = vmul.f32 1.0, %v1385
    %1387 = vrot.lane.b32.xlu0 %v1337, 96
    %v1388 = vpop.permute.xlu0 %1387
    %v1390 = vmul.f32 %v1362, %v1388
    %1392 = vrot.lane.b32.xlu0 %v1390, 64
    %v1393 = vpop.permute.xlu0 %1392
    %v1395 = vadd.f32 %v1317, %v1393
    %v1396 = vtanh.pop %v1395
    %v1397 = vsub.f32 1.0, %v1386
    %1399 = vrot.lane.b32.xlu0 %v1396, 96
    %v1400 = vpop.permute.xlu0 %1399
    %v1402 = vmul.f32 %v1397, %v1400
    %v1403 = vmul.f32 %v1386, %v1229
    %v1404 = vadd.f32 %v1402, %v1403
    %v1405 = vsel %vm72, %v1293, 0
    %1407 = vmatpush.msra.mxu0 0.0
    %1408 = vmatpush.msra.mxu0 0.0
    %1409 = vmatpush.msra.mxu0 0.0
    %1410 = vmatpush.msra.mxu0 0.0
    %1411 = vmatpush.msra.mxu0 0.0
    %1412 = vmatpush.msra.mxu0 0.0
    %1413 = vmatpush.msra.mxu0 0.0
    %1414 = vmatpush.msra.mxu0 0.0
    %1415 = vmatpush.msra.mxu0 0.0
    %1416 = vmatpush.msra.mxu0 0.0
    %1417 = vmatpush.msra.mxu0 0.0
    %1418 = vmatpush.msra.mxu0 0.0
    %1419 = vmatpush.msra.mxu0 %v141
    %1420 = vmatpush.msra.mxu0 %v140
    %1421 = vmatpush.msra.mxu0 %v139
    %1422 = vmatpush.msra.mxu0 %v138
    %1423 = vmatmul.f32.gmra.mxu0 %v1405
    %v1424 = vpop.f32.mrf.mxu0
    %v1425 = vadd.f32 %v164, %v1424
    %1426 = vdwg.mxu0
    %v1427 = vadd.f32 %v136, %v1425
    %v1428 = vxor.u32 %v1427, 2147483648
    %v1429 = vmul.f32 %v1428, 1.442695
    %v1430 = vpow.pop %v1429
    %v1431 = vadd.f32 %v1430, 1.0
    %v1432 = vrcp.pop %v1431
    %v1433 = vmul.f32 %v1431, %v1432
    %v1434 = vsub.f32 1.0, %v1433
    %v1435 = vmul.f32 %v1432, %v1434
    %v1436 = vadd.f32 %v1432, %v1435
    %vm1437 = vweird.f32 %v1431
    %vm1438 = vweird.f32 %v1432
    %vm1439 = vmor %vm1437, %vm1438
    %v1440 = vsel %vm1439, %v1432, %v1436
    %v1441 = vand.u32 2147483647, %v1431
    %vm1442 = vcmp.eq.f32.partialorder %v1441, 8.507059e+37
    %v1443 = vand.u32 %v1431, 2147483648
    %v1444 = vor.u32 1.1754944e-38, %v1443
    %v1445 = vsel %vm1442, %v1444, %v1440
    %v1446 = vmul.f32 1.0, %v1445
    %1448 = vrot.lane.b32.xlu0 %v1425, 64
    %v1449 = vpop.permute.xlu0 %1448
    %v1451 = vmul.f32 %v1446, %v1449
    %1453 = vrot.lane.b32.xlu0 %v1451, 64
    %v1454 = vpop.permute.xlu0 %1453
    %v1456 = vadd.f32 %v136, %v1454
    %v1457 = vtanh.pop %v1456
    %v1458 = vsub.f32 1.0, %v1446
    %1460 = vrot.lane.b32.xlu0 %v1457, 96
    %v1461 = vpop.permute.xlu0 %1460
    %v1463 = vmul.f32 %v1458, %v1461
    %v1464 = vmul.f32 %v1446, %v1290
    %v1465 = vadd.f32 %v1463, %v1464
    %1467 = vrot.lane.b32.xlu0 %v1465, 96
    %v1468 = vpop.permute.xlu0 %1467
    %v1470 = vsel %vm72, %v1468, %v1404
    %v1472 = vsel %vm245, %v1470, 0
    %1474 = vmatpush.msra.mxu0 0.0
    %1475 = vmatpush.msra.mxu0 0.0
    %1476 = vmatpush.msra.mxu0 0.0
    %1477 = vmatpush.msra.mxu0 0.0
    %1478 = vmatpush.msra.mxu0 0.0
    %1479 = vmatpush.msra.mxu0 0.0
    %1480 = vmatpush.msra.mxu0 0.0
    %1481 = vmatpush.msra.mxu0 0.0
    %1482 = vmatpush.msra.mxu0 %v157
    %1483 = vmatpush.msra.mxu0 %v155
    %1484 = vmatpush.msra.mxu0 %v153
    %1485 = vmatpush.msra.mxu0 %v151
    %1486 = vmatpush.msra.mxu0 %v149
    %1487 = vmatpush.msra.mxu0 %v147
    %1488 = vmatpush.msra.mxu0 %v145
    %1489 = vmatpush.msra.mxu0 %v143
    %1490 = vmatmul.f32.gmra.mxu0 %v1472
    %v1491 = vpop.f32.mrf.mxu0
    %v1492 = vadd.f32 %v241, %v1491
    %1493 = vdwg.mxu0
    %1494 = vmatpush.msra.mxu0 0.0
    %1495 = vmatpush.msra.mxu0 0.0
    %1496 = vmatpush.msra.mxu0 0.0
    %1497 = vmatpush.msra.mxu0 0.0
    %1498 = vmatpush.msra.mxu0 0.0
    %1499 = vmatpush.msra.mxu0 0.0
    %1500 = vmatpush.msra.mxu0 0.0
    %1501 = vmatpush.msra.mxu0 0.0
    %1502 = vmatpush.msra.mxu0 %v158
    %1503 = vmatpush.msra.mxu0 %v156
    %1504 = vmatpush.msra.mxu0 %v154
    %1505 = vmatpush.msra.mxu0 %v152
    %1506 = vmatpush.msra.mxu0 %v150
    %1507 = vmatpush.msra.mxu0 %v148
    %1508 = vmatpush.msra.mxu0 %v146
    %1509 = vmatpush.msra.mxu0 %v144
    %1510 = vmatmul.f32.gmra.mxu0 %v1472
    %v1511 = vpop.f32.mrf.mxu0
    %v1512 = vadd.f32 %v242, %v1511
    %1513 = vdwg.mxu0
    %1515 = vrot.lane.b32.xlu0 %v1492, 32
    %v1516 = vpop.permute.xlu0 %1515
    %v1518 = vadd.f32 %v1492, %v1516
    %v1519 = vxor.u32 %v1518, 2147483648
    %v1520 = vmul.f32 %v1519, 1.442695
    %v1521 = vpow.pop %v1520
    %v1522 = vadd.f32 %v1521, 1.0
    %v1523 = vrcp.pop %v1522
    %v1524 = vmul.f32 %v1522, %v1523
    %v1525 = vsub.f32 1.0, %v1524
    %v1526 = vmul.f32 %v1523, %v1525
    %v1527 = vadd.f32 %v1523, %v1526
    %vm1528 = vweird.f32 %v1522
    %vm1529 = vweird.f32 %v1523
    %vm1530 = vmor %vm1528, %vm1529
    %v1531 = vsel %vm1530, %v1523, %v1527
    %v1532 = vand.u32 2147483647, %v1522
    %vm1533 = vcmp.eq.f32.partialorder %v1532, 8.507059e+37
    %v1534 = vand.u32 %v1522, 2147483648
    %v1535 = vor.u32 1.1754944e-38, %v1534
    %v1536 = vsel %vm1533, %v1535, %v1531
    %v1537 = vmul.f32 1.0, %v1536
    %1539 = vrot.lane.b32.xlu0 %v1512, 32
    %v1540 = vpop.permute.xlu0 %1539
    %v1542 = vadd.f32 %v1492, %v1540
    %v1543 = vxor.u32 %v1542, 2147483648
    %v1544 = vmul.f32 %v1543, 1.442695
    %v1545 = vpow.pop %v1544
    %v1546 = vadd.f32 %v1545, 1.0
    %v1547 = vrcp.pop %v1546
    %v1548 = vmul.f32 %v1546, %v1547
    %v1549 = vsub.f32 1.0, %v1548
    %v1550 = vmul.f32 %v1547, %v1549
    %v1551 = vadd.f32 %v1547, %v1550
    %vm1552 = vweird.f32 %v1546
    %vm1553 = vweird.f32 %v1547
    %vm1554 = vmor %vm1552, %vm1553
    %v1555 = vsel %vm1554, %v1547, %v1551
    %v1556 = vand.u32 2147483647, %v1546
    %vm1557 = vcmp.eq.f32.partialorder %v1556, 8.507059e+37
    %v1558 = vand.u32 %v1546, 2147483648
    %v1559 = vor.u32 1.1754944e-38, %v1558
    %v1560 = vsel %vm1557, %v1559, %v1555
    %v1561 = vmul.f32 1.0, %v1560
    %1562 = vrot.lane.b32.xlu0 %v1512, 96
    %v1563 = vpop.permute.xlu0 %1562
    %v1565 = vmul.f32 %v1537, %v1563
    %1567 = vrot.lane.b32.xlu0 %v1565, 64
    %v1568 = vpop.permute.xlu0 %1567
    %v1570 = vadd.f32 %v1492, %v1568
    %v1571 = vtanh.pop %v1570
    %v1572 = vsub.f32 1.0, %v1561
    %1574 = vrot.lane.b32.xlu0 %v1571, 96
    %v1575 = vpop.permute.xlu0 %1574
    %v1577 = vmul.f32 %v1572, %v1575
    %v1578 = vmul.f32 %v1561, %v1404
    %v1579 = vadd.f32 %v1577, %v1578
    %1580 = vst.msk [vmem:[#allocation6] sm:$0xff] %vm72, %v1468
    %1582 = vrot.lane.b32.xlu0 %v1579, 96
    %v1583 = vpop.permute.xlu0 %1582
    %s1585 = scalar_lea.vmem [#allocation6], 8
    %1586 = vst.msk [vmem:[%s1585] sm:$0xff] %vm72, %v1583
    %v1587 = vld [vmem:[%s8] sm:$0xff]
    %v1588 = vld [vmem:[%s8 + $0x8] sm:$0xff]
    %v1589 = vld [vmem:[%s8 + $0x10] sm:$0xff]
    %v1590 = vld [vmem:[%s8 + $0x18] sm:$0xff]
    %v1591 = vld [vmem:[#allocation2] sm:$0x1]
    %v1593 = vperm.slane %v1591, 0
    %v1595 = vsel %vm72, %v1583, 0
    %1597 = vmatpush.msra.mxu0 0.0
    %1598 = vmatpush.msra.mxu0 0.0
    %1599 = vmatpush.msra.mxu0 0.0
    %1600 = vmatpush.msra.mxu0 0.0
    %1601 = vmatpush.msra.mxu0 0.0
    %1602 = vmatpush.msra.mxu0 0.0
    %1603 = vmatpush.msra.mxu0 0.0
    %1604 = vmatpush.msra.mxu0 0.0
    %1605 = vmatpush.msra.mxu0 0.0
    %1606 = vmatpush.msra.mxu0 0.0
    %1607 = vmatpush.msra.mxu0 0.0
    %1608 = vmatpush.msra.mxu0 0.0
    %1609 = vmatpush.msra.mxu0 %v1590
    %1610 = vmatpush.msra.mxu0 %v1589
    %1611 = vmatpush.msra.mxu0 %v1588
    %1612 = vmatpush.msra.mxu0 %v1587
    %1613 = vmatmul.f32.gmra.mxu0 %v1595
    %v1614 = vpop.f32.mrf.mxu0
    %v1615 = vadd.f32 %v1593, %v1614
    %1616 = vdwg.mxu0
    %v1617 = vxor.u32 %v1615, 2147483648
    %v1618 = vmul.f32 %v1617, 1.442695
    %v1619 = vpow.pop %v1618
    %v1620 = vadd.f32 %v1619, 1.0
    %v1621 = vrcp.pop %v1620
    %v1622 = vmul.f32 %v1620, %v1621
    %v1623 = vsub.f32 1.0, %v1622
    %v1624 = vmul.f32 %v1621, %v1623
    %v1625 = vadd.f32 %v1621, %v1624
    %vm1626 = vweird.f32 %v1620
    %vm1627 = vweird.f32 %v1621
    %vm1628 = vmor %vm1626, %vm1627
    %v1629 = vsel %vm1628, %v1621, %v1625
    %v1630 = vand.u32 2147483647, %v1620
    %vm1631 = vcmp.eq.f32.partialorder %v1630, 8.507059e+37
    %v1632 = vand.u32 %v1620, 2147483648
    %v1633 = vor.u32 1.1754944e-38, %v1632
    %v1634 = vsel %vm1631, %v1633, %v1629
    %v1635 = vmul.f32 1.0, %v1634
    %vm1636 = vcmask 7168
    %1637 = vst.msk [vmem:[%s10] sm:$0xff] %vm1636, %v1635
    // Predicated region
    $region46: #{tpu_custom_call.1} parent=1 // pred_check
      _
    $region47: #{tpu_custom_call.1} parent=1 // pred_check_branch
      %1639 = sbr.rel (0) target = $region49
    $region48: #{tpu_custom_call.1} parent=1 // pred_region
      _
    $region49: #{tpu_custom_call.1} parent=1 // pred_fallthru
      _
    // Predicated region
    $region50: #{tpu_custom_call.1} parent=1 // pred_check
      _
    $region51: #{tpu_custom_call.1} parent=1 // pred_check_branch
      %1641 = sbr.rel (0) target = $region53
    $region52: #{tpu_custom_call.1} parent=1 // pred_region
      %1643 = vsyncadd [#allocation5], 0
      %s1644 = sshll.u32 [#allocation6], 4
      %s1645 = int_to_ptr.vmem [resolvable:$true] %s1644
      %s1646 = sshll.u32 %s11, 4
      %s1647 = int_to_ptr.hbm [resolvable:$true] %s1646
      %1652 = dma.vmem_to_hbm [thread:$0]  %s1645, 256, %s1647, [#allocation5], 128, 128, 8
    $region53: #{tpu_custom_call.1} parent=1 // pred_fallthru
      _
    // Predicated region
    $region54: #{tpu_custom_call.1} parent=1 // pred_check
      _
    $region55: #{tpu_custom_call.1} parent=1 // pred_check_branch
      %1654 = sbr.rel (0) target = $region57
    $region56: #{tpu_custom_call.1} parent=1 // pred_region
      _
    $region57: #{tpu_custom_call.1} parent=1 // pred_fallthru
      _
    // Predicated region
    $region58: #{tpu_custom_call.1} parent=1 // pred_check
      _
    $region59: #{tpu_custom_call.1} parent=1 // pred_check_branch
      %1656 = sbr.rel (0) target = $region61
    $region60: #{tpu_custom_call.1} parent=1 // pred_region
      %1658 = dma.done [#allocation5], 256
    $region61: #{tpu_custom_call.1} parent=1 // pred_fallthru
      _
    %1659 = vsyncpa [#allocation4], 1
    %1660 = vsyncpa [#allocation5], 1

</llo_original>
